<compile_context>
chip_gen: v7x
topology: tpu7x:2x2x1
jax: 0.10.0
libtpu: 0.0.40
codegen_flags: <defaults>
</compile_context>

<pallas_src>
import jax
import jax.numpy as jnp
from jax.experimental import pallas as pl
from jax.experimental.pallas import tpu as pltpu

F = 128          # feature width fixed by the module (split(384) into 3 x 128)
VEC = 3 * F      # vi flattened over (feature, xyz): 384 interleaved lanes
OUT2 = 5 * F     # expanded layer-2 width: 384 (s1 interleaved) + 128 (s2) + 128 (s3)


def _round_up(x, m):
    return ((x + m - 1) // m) * m


# ----------------------------------------------------------------------------
# Kernel bodies
# ----------------------------------------------------------------------------
def _finish(uvi, vvi, si_ref, sel_ref, w1a_ref, w1b_ref, b1_ref, w2e_ref, b2e_ref,
            dviu_ref, dsiu_ref):
    """Shared tail: norms / MLP / outputs, starting from interleaved Uvi/Vvi."""
    sel = sel_ref[...]                                     # (VEC, F) exact 0/1
    vsq = vvi * vvi
    uv = uvi * vvi
    # Compress the 3 xyz lanes of each feature: (tm, VEC) @ (VEC, F).
    v_norm = jnp.sqrt(jnp.dot(vsq, sel, preferred_element_type=jnp.float32))
    sp = jnp.dot(uv, sel, preferred_element_type=jnp.float32)

    # First MLP layer without materializing the (tm, 256) concat: two K=128 dots.
    h = (jnp.dot(v_norm, w1a_ref[...], preferred_element_type=jnp.float32)
         + jnp.dot(si_ref[...], w1b_ref[...], preferred_element_type=jnp.float32)
         + b1_ref[...])
    h = h * jax.nn.sigmoid(h)                              # SiLU

    # Second layer with s1 pre-expanded to the interleaved 384-lane layout
    # (w2e columns: [s1 repeated per xyz | s2 | s3]).
    out = jnp.dot(h, w2e_ref[...], preferred_element_type=jnp.float32) + b2e_ref[...]
    s1e = out[:, :VEC]
    s2 = out[:, VEC:VEC + F]
    s3 = out[:, VEC + F:]

    dviu_ref[...] = uvi * s1e                              # interleaved (tm, VEC)
    dsiu_ref[...] = sp * s2 + s3


def _update_kernel_roll(vi_ref, si_ref, cu_ref, cv_ref, sel_ref, w1a_ref, w1b_ref,
                        b1_ref, w2e_ref, b2e_ref, dviu_ref, dsiu_ref):
    """Preferred path: xyz de-interleave of the 3x3 linears via XLU lane rolls."""
    x = vi_ref[...]                                        # (tm, VEC) interleaved xyz

    # Direction probe: makes the kernel correct whichever rotation convention
    # pltpu.roll uses (out[i] = in[i-shift] vs out[i] = in[i+shift]).
    lane = jax.lax.broadcasted_iota(jnp.float32, (8, VEC), 1)
    probe = pltpu.roll(lane, 1, axis=1)
    is_jnp_dir = probe[0:1, 0:1] == 383.0

    rp1 = pltpu.roll(x, 1, axis=1)
    rm1 = pltpu.roll(x, VEC - 1, axis=1)
    rp2 = pltpu.roll(x, 2, axis=1)
    rm2 = pltpu.roll(x, VEC - 2, axis=1)
    xp1 = jnp.where(is_jnp_dir, rm1, rp1)                  # x[:, L + 1]
    xm1 = jnp.where(is_jnp_dir, rp1, rm1)                  # x[:, L - 1]
    xp2 = jnp.where(is_jnp_dir, rm2, rp2)                  # x[:, L + 2]
    xm2 = jnp.where(is_jnp_dir, rp2, rm2)                  # x[:, L - 2]

    cu = cu_ref[...]                                       # (5, VEC) rows: d=-2,-1,0,+1,+2
    cv = cv_ref[...]
    uvi = (cu[2:3] * x + cu[3:4] * xp1 + cu[1:2] * xm1
           + cu[4:5] * xp2 + cu[0:1] * xm2)
    vvi = (cv[2:3] * x + cv[3:4] * xp1 + cv[1:2] * xm1
           + cv[4:5] * xp2 + cv[0:1] * xm2)
    _finish(uvi, vvi, si_ref, sel_ref, w1a_ref, w1b_ref, b1_ref, w2e_ref, b2e_ref,
            dviu_ref, dsiu_ref)


def _update_kernel_matmul(vi_ref, si_ref, buv_ref, sel_ref, w1a_ref, w1b_ref,
                          b1_ref, w2e_ref, b2e_ref, dviu_ref, dsiu_ref):
    """Fallback path: block-diagonal (384 x 768) MXU matmul does Luu/Luv + keeps
    the interleaved layout (only conventional ops, guaranteed to lower)."""
    x = vi_ref[...]                                        # (tm, VEC)
    g = jnp.dot(x, buv_ref[...], preferred_element_type=jnp.float32)   # (tm, 2*VEC)
    uvi = g[:, :VEC]
    vvi = g[:, VEC:]
    _finish(uvi, vvi, si_ref, sel_ref, w1a_ref, w1b_ref, b1_ref, w2e_ref, b2e_ref,
            dviu_ref, dsiu_ref)


# ----------------------------------------------------------------------------
# Wrapper-side weight preprocessing (tiny, one-time per call / fused under jit)
# ----------------------------------------------------------------------------
def _roll_coeffs(w):
    """Per-lane coefficients for the roll-based 3x3 transform.
    Row k corresponds to shift d = k - 2; coef[L] = w[L%3, L%3 + d] (0 outside)."""
    a = jnp.arange(VEC) % 3
    rows = []
    for d in (-2, -1, 0, 1, 2):
        b = a + d
        valid = (b >= 0) & (b <= 2)
        rows.append(jnp.where(valid, w[a, jnp.clip(b, 0, 2)], 0.0))
    return jnp.stack(rows).astype(jnp.float32)             # (5, VEC)


def _blockdiag_pair(wuu, wuv):
    """(VEC, 2*VEC) block-diagonal matrix computing [Uvi_flat | Vvi_flat]."""
    idx = jnp.arange(VEC)
    same_feature = (idx[:, None] // 3) == (idx[None, :] // 3)
    a_out = idx[None, :] % 3
    b_in = idx[:, None] % 3
    bu = jnp.where(same_feature, wuu[a_out, b_in], 0.0)
    bv = jnp.where(same_feature, wuv[a_out, b_in], 0.0)
    return jnp.concatenate([bu, bv], axis=1).astype(jnp.float32)


def _prepare_mlp(w1, b1, w2, b2):
    # Exact 0/1 selection matrix compressing the 3 xyz lanes of each feature.
    sel = (jnp.arange(VEC)[:, None] // 3 == jnp.arange(F)[None, :]).astype(jnp.float32)
    w1_t = w1.T.astype(jnp.float32)                        # (256, 128)
    w1a, w1b = w1_t[:F], w1_t[F:]
    b1r = b1.reshape(1, F).astype(jnp.float32)
    w2_t = w2.T.astype(jnp.float32)                        # (128, 384)
    w2e = jnp.concatenate(
        [jnp.repeat(w2_t[:, :F], 3, axis=1), w2_t[:, F:2 * F], w2_t[:, 2 * F:]],
        axis=1)                                            # (128, 640)
    b2f = b2.astype(jnp.float32)
    b2e = jnp.concatenate(
        [jnp.repeat(b2f[:F], 3), b2f[F:2 * F], b2f[2 * F:]]).reshape(1, OUT2)
    return sel, w1a, w1b, b1r, w2e, b2e


# ----------------------------------------------------------------------------
# pallas_call wrapper
# ----------------------------------------------------------------------------
def _forward(impl, vi, si, params, tm=None):
    wuu, wuv, w1, b1, w2, b2 = params
    B = vi.shape[0]

    # Contiguous reshape (B,128,3)->(B,384): a layout-compatible view, no HBM copy.
    vi_flat = vi.reshape(B, VEC).astype(jnp.float32)
    si_f = si.astype(jnp.float32)

    if tm is None:
        # >= 4 blocks when B allows it (megacore sharding on v7x); <= 512 rows so
        # the double-buffered working set stays well inside default scoped VMEM.
        tm = min(512, max(8, _round_up(pl.cdiv(B, 4), 8)))
    n_blocks = pl.cdiv(B, tm)                              # ragged last block is masked

    sel, w1a, w1b, b1r, w2e, b2e = _prepare_mlp(w1, b1, w2, b2)

    def tile_map(i):
        return (i, 0)

    def const_map(i):
        return (0, 0)

    if impl == "roll":
        kernel = _update_kernel_roll
        extra_args = (_roll_coeffs(wuu.astype(jnp.float32)),
                      _roll_coeffs(wuv.astype(jnp.float32)))
        extra_specs = [pl.BlockSpec((5, VEC), const_map),
                       pl.BlockSpec((5, VEC), const_map)]
    else:
        kernel = _update_kernel_matmul
        extra_args = (_blockdiag_pair(wuu.astype(jnp.float32),
                                      wuv.astype(jnp.float32)),)
        extra_specs = [pl.BlockSpec((VEC, 2 * VEC), const_map)]

    matmul_flops = 2 * VEC * F * 2 + 2 * F * F * 2 + 2 * F * OUT2
    cost = pl.CostEstimate(
        flops=int(B * (matmul_flops + 40 * VEC)),
        transcendentals=int(B * 2 * F),
        bytes_accessed=int(B * (2 * VEC + 2 * F) * 4),
    )

    dviu_flat, dsiu = pl.pallas_call(
        kernel,
        out_shape=(jax.ShapeDtypeStruct((B, VEC), jnp.float32),
                   jax.ShapeDtypeStruct((B, F), jnp.float32)),
        grid=(n_blocks,),
        in_specs=[pl.BlockSpec((tm, VEC), tile_map),       # vi (interleaved xyz)
                  pl.BlockSpec((tm, F), tile_map),         # si
                  *extra_specs,                            # roll coeffs / block-diag
                  pl.BlockSpec((VEC, F), const_map),       # xyz compression (0/1)
                  pl.BlockSpec((F, F), const_map),         # w1a (v_norm half)
                  pl.BlockSpec((F, F), const_map),         # w1b (si half)
                  pl.BlockSpec((1, F), const_map),         # b1
                  pl.BlockSpec((F, OUT2), const_map),      # w2 expanded
                  pl.BlockSpec((1, OUT2), const_map)],     # b2 expanded
        out_specs=(pl.BlockSpec((tm, VEC), tile_map),      # d_viu (interleaved xyz)
                   pl.BlockSpec((tm, F), tile_map)),       # d_siu
        compiler_params=pltpu.CompilerParams(
            dimension_semantics=("parallel",)),
        cost_estimate=cost,
    )(vi_flat, si_f, *extra_args, sel, w1a, w1b, b1r, w2e, b2e)

    return dviu_flat.reshape(B, F, 3), dsiu                # free contiguous reshape


# One-time implementation selection: prefer the XLU roll de-interleave, verified
# numerically on a tiny problem; otherwise use the MXU block-diagonal fallback.
_IMPL = None


def _select_impl():
    global _IMPL
    if _IMPL is None:
        ks = jax.random.split(jax.random.PRNGKey(1234), 8)
        vi = jax.random.normal(ks[0], (8, F, 3), dtype=jnp.float32)
        si = jax.random.normal(ks[1], (8, F), dtype=jnp.float32)
        params = (jax.random.normal(ks[2], (3, 3), jnp.float32),
                  jax.random.normal(ks[3], (3, 3), jnp.float32),
                  jax.random.normal(ks[4], (F, 2 * F), jnp.float32) * 0.05,
                  jax.random.normal(ks[5], (F,), jnp.float32) * 0.05,
                  jax.random.normal(ks[6], (3 * F, F), jnp.float32) * 0.05,
                  jax.random.normal(ks[7], (3 * F,), jnp.float32) * 0.05)
        try:
            got = _forward("roll", vi, si, params, tm=8)
            ref = update_reference(vi, si, params)
            ok = (bool(jnp.allclose(got[0], ref[0], rtol=1e-3, atol=1e-3)) and
                  bool(jnp.allclose(got[1], ref[1], rtol=1e-3, atol=1e-3)))
            _IMPL = "roll" if ok else "matmul"
        except Exception:
            _IMPL = "matmul"
    return _IMPL


def update_forward(vi, si, params, tm=None):
    """vi: (B, 128, 3), si: (B, 128) -> (d_viu (B, 128, 3), d_siu (B, 128))."""
    return _forward(_select_impl(), vi, si, params, tm=tm)


def update_reference(vi, si, params):
    """Pure-JAX reference mirroring the PyTorch forward exactly."""
    wuu, wuv, w1, b1, w2, b2 = params
    uvi = vi @ wuu.T
    vvi = vi @ wuv.T
    v_norm = jnp.sqrt(jnp.sum(vvi * vvi, axis=-1))
    stack = jnp.concatenate([v_norm, si], axis=1)
    sp = jnp.sum(uvi * vvi, axis=-1)
    h = stack @ w1.T + b1
    h = h * jax.nn.sigmoid(h)
    split = h @ w2.T + b2
    s1, s2, s3 = split[:, :F], split[:, F:2 * F], split[:, 2 * F:]
    d_viu = uvi * s1[:, :, None]
    d_siu = sp * s2 + s3
    return d_viu, d_siu


if __name__ == "__main__":
    key = jax.random.PRNGKey(0)
    k_vi, k_si, k_wuu, k_wuv, k_w1, k_b1, k_w2, k_b2 = jax.random.split(key, 8)

    B = 16
    vi = jax.random.normal(k_vi, (B, F, 3), dtype=jnp.float32)
    si = jax.random.normal(k_si, (B, F), dtype=jnp.float32)

    # Deterministic parameter init (shapes match the PyTorch module)
    wuu = jax.random.normal(k_wuu, (3, 3), dtype=jnp.float32) * 0.5       # Luu.weight
    wuv = jax.random.normal(k_wuv, (3, 3), dtype=jnp.float32) * 0.5       # Luv.weight
    w1 = jax.random.normal(k_w1, (F, 2 * F), dtype=jnp.float32) * 0.05    # Ls[0].weight
    b1 = jax.random.normal(k_b1, (F,), dtype=jnp.float32) * 0.05          # Ls[0].bias
    w2 = jax.random.normal(k_w2, (3 * F, F), dtype=jnp.float32) * 0.05    # Ls[2].weight
    b2 = jax.random.normal(k_b2, (3 * F,), dtype=jnp.float32) * 0.05      # Ls[2].bias
    params = (wuu, wuv, w1, b1, w2, b2)

    ref_viu, ref_siu = update_reference(vi, si, params)

    # Auto-selected implementation (roll/XLU de-interleave if supported).
    d_viu, d_siu = update_forward(vi, si, params)
    jax.block_until_ready((d_viu, d_siu))
    assert d_viu.shape == (B, F, 3) and d_siu.shape == (B, F)
    assert jnp.allclose(d_viu, ref_viu, rtol=1e-4, atol=1e-4)
    assert jnp.allclose(d_siu, ref_siu, rtol=1e-4, atol=1e-4)

    # Ragged grid (B not a multiple of the tile): relies on Pallas masking of the
    # partial last block -- no wrapper padding copies.
    B2 = 20
    vi2 = jax.random.normal(k_vi, (B2, F, 3), dtype=jnp.float32)
    si2 = jax.random.normal(k_si, (B2, F), dtype=jnp.float32)
    d_viu2, d_siu2 = update_forward(vi2, si2, params, tm=8)
    jax.block_until_ready((d_viu2, d_siu2))
    ref_viu2, ref_siu2 = update_reference(vi2, si2, params)
    assert jnp.allclose(d_viu2, ref_viu2, rtol=1e-4, atol=1e-4)
    assert jnp.allclose(d_siu2, ref_siu2, rtol=1e-4, atol=1e-4)

    # Exercise the MXU-based fallback path explicitly as well.
    d_viu3, d_siu3 = _forward("matmul", vi, si, params)
    jax.block_until_ready((d_viu3, d_siu3))
    assert jnp.allclose(d_viu3, ref_viu, rtol=1e-4, atol=1e-4)
    assert jnp.allclose(d_siu3, ref_siu, rtol=1e-4, atol=1e-4)

    print("KERNEL_OK")
</pallas_src>

<mosaic_0001>
module attributes {stable_mosaic.version = 11 : i64} {
  func.func @_update_kernel_matmul(%arg0: i32, %arg1: memref<8x384xf32, #tpu.memory_space<vmem>>, %arg2: memref<8x128xf32, #tpu.memory_space<vmem>>, %arg3: memref<384x768xf32, #tpu.memory_space<vmem>>, %arg4: memref<384x128xf32, #tpu.memory_space<vmem>>, %arg5: memref<128x128xf32, #tpu.memory_space<vmem>>, %arg6: memref<128x128xf32, #tpu.memory_space<vmem>>, %arg7: memref<1x128xf32, #tpu.memory_space<vmem>>, %arg8: memref<128x640xf32, #tpu.memory_space<vmem>>, %arg9: memref<1x640xf32, #tpu.memory_space<vmem>>, %arg10: memref<8x384xf32, #tpu.memory_space<vmem>>, %arg11: memref<8x128xf32, #tpu.memory_space<vmem>>) attributes {dimension_semantics = [#tpu.dimension_semantics<parallel>], iteration_bounds = array<i64: 2>, scalar_prefetch = 0 : i64, scratch_operands = 0 : i64, tpu.core_type = #tpu.core_type<tc>, window_params = [{transform_indices = @transform_0, window_bounds = array<i64: 8, 384>}, {transform_indices = @transform_1, window_bounds = array<i64: 8, 128>}, {pipeline_mode = #tpu.pipeline_mode<synchronous>, transform_indices = @transform_2, window_bounds = array<i64: 384, 768>}, {pipeline_mode = #tpu.pipeline_mode<synchronous>, transform_indices = @transform_3, window_bounds = array<i64: 384, 128>}, {pipeline_mode = #tpu.pipeline_mode<synchronous>, transform_indices = @transform_4, window_bounds = array<i64: 128, 128>}, {pipeline_mode = #tpu.pipeline_mode<synchronous>, transform_indices = @transform_5, window_bounds = array<i64: 128, 128>}, {pipeline_mode = #tpu.pipeline_mode<synchronous>, transform_indices = @transform_6, window_bounds = array<i64: 1, 128>}, {pipeline_mode = #tpu.pipeline_mode<synchronous>, transform_indices = @transform_7, window_bounds = array<i64: 128, 640>}, {pipeline_mode = #tpu.pipeline_mode<synchronous>, transform_indices = @transform_8, window_bounds = array<i64: 1, 640>}, {transform_indices = @transform_9, window_bounds = array<i64: 8, 384>}, {transform_indices = @transform_10, window_bounds = array<i64: 8, 128>}]} {
    %c0 = arith.constant 0 : index
    %c0_0 = arith.constant 0 : index
    %0 = vector.load %arg1[%c0, %c0_0] : memref<8x384xf32, #tpu.memory_space<vmem>>, vector<8x384xf32>
    %c0_1 = arith.constant 0 : index
    %c0_2 = arith.constant 0 : index
    %1 = vector.load %arg3[%c0_1, %c0_2] : memref<384x768xf32, #tpu.memory_space<vmem>>, vector<384x768xf32>
    %cst = arith.constant dense<0.000000e+00> : vector<8x768xf32>
    %2 = tpu.matmul %0, %1, %cst {dimension_numbers = #tpu.dot_dimension_numbers<[1], [0], [0], [1], [0, 0, 1, 1], [], []>} : vector<8x384xf32>, vector<384x768xf32>, vector<8x768xf32> -> vector<8x768xf32>
    %3 = vector.extract_strided_slice %2 {offsets = [0, 0], sizes = [8, 384], strides = [1, 1]} : vector<8x768xf32> to vector<8x384xf32>
    %4 = vector.extract_strided_slice %2 {offsets = [0, 384], sizes = [8, 384], strides = [1, 1]} : vector<8x768xf32> to vector<8x384xf32>
    %c0_3 = arith.constant 0 : index
    %c0_4 = arith.constant 0 : index
    %5 = vector.load %arg4[%c0_3, %c0_4] : memref<384x128xf32, #tpu.memory_space<vmem>>, vector<384x128xf32>
    %6 = arith.mulf %4, %4 : vector<8x384xf32>
    %7 = arith.mulf %3, %4 : vector<8x384xf32>
    %cst_5 = arith.constant dense<0.000000e+00> : vector<8x128xf32>
    %8 = tpu.matmul %6, %5, %cst_5 {dimension_numbers = #tpu.dot_dimension_numbers<[1], [0], [0], [1], [0, 0, 1, 1], [], []>} : vector<8x384xf32>, vector<384x128xf32>, vector<8x128xf32> -> vector<8x128xf32>
    %9 = math.sqrt %8 : vector<8x128xf32>
    %cst_6 = arith.constant dense<0.000000e+00> : vector<8x128xf32>
    %10 = tpu.matmul %7, %5, %cst_6 {dimension_numbers = #tpu.dot_dimension_numbers<[1], [0], [0], [1], [0, 0, 1, 1], [], []>} : vector<8x384xf32>, vector<384x128xf32>, vector<8x128xf32> -> vector<8x128xf32>
    %c0_7 = arith.constant 0 : index
    %c0_8 = arith.constant 0 : index
    %11 = vector.load %arg5[%c0_7, %c0_8] : memref<128x128xf32, #tpu.memory_space<vmem>>, vector<128x128xf32>
    %cst_9 = arith.constant dense<0.000000e+00> : vector<8x128xf32>
    %12 = tpu.matmul %9, %11, %cst_9 {dimension_numbers = #tpu.dot_dimension_numbers<[1], [0], [0], [1], [0, 0, 1, 1], [], []>} : vector<8x128xf32>, vector<128x128xf32>, vector<8x128xf32> -> vector<8x128xf32>
    %c0_10 = arith.constant 0 : index
    %c0_11 = arith.constant 0 : index
    %13 = vector.load %arg2[%c0_10, %c0_11] : memref<8x128xf32, #tpu.memory_space<vmem>>, vector<8x128xf32>
    %c0_12 = arith.constant 0 : index
    %c0_13 = arith.constant 0 : index
    %14 = vector.load %arg6[%c0_12, %c0_13] : memref<128x128xf32, #tpu.memory_space<vmem>>, vector<128x128xf32>
    %cst_14 = arith.constant dense<0.000000e+00> : vector<8x128xf32>
    %15 = tpu.matmul %13, %14, %cst_14 {dimension_numbers = #tpu.dot_dimension_numbers<[1], [0], [0], [1], [0, 0, 1, 1], [], []>} : vector<8x128xf32>, vector<128x128xf32>, vector<8x128xf32> -> vector<8x128xf32>
    %16 = arith.addf %12, %15 : vector<8x128xf32>
    %c0_15 = arith.constant 0 : index
    %c0_16 = arith.constant 0 : index
    %17 = vector.load %arg7[%c0_15, %c0_16] : memref<1x128xf32, #tpu.memory_space<vmem>>, vector<1x128xf32>
    %18 = vector.broadcast %17 : vector<1x128xf32> to vector<8x128xf32>
    %19 = arith.addf %16, %18 : vector<8x128xf32>
    %20 = arith.negf %19 : vector<8x128xf32>
    %21 = math.exp %20 : vector<8x128xf32>
    %cst_17 = arith.constant 1.000000e+00 : f32
    %22 = vector.broadcast %cst_17 : f32 to vector<8x128xf32>
    %23 = arith.addf %22, %21 : vector<8x128xf32>
    %24 = arith.divf %22, %23 : vector<8x128xf32>
    %25 = arith.mulf %19, %24 : vector<8x128xf32>
    %c0_18 = arith.constant 0 : index
    %c0_19 = arith.constant 0 : index
    %26 = vector.load %arg8[%c0_18, %c0_19] : memref<128x640xf32, #tpu.memory_space<vmem>>, vector<128x640xf32>
    %cst_20 = arith.constant dense<0.000000e+00> : vector<8x640xf32>
    %27 = tpu.matmul %25, %26, %cst_20 {dimension_numbers = #tpu.dot_dimension_numbers<[1], [0], [0], [1], [0, 0, 1, 1], [], []>} : vector<8x128xf32>, vector<128x640xf32>, vector<8x640xf32> -> vector<8x640xf32>
    %c0_21 = arith.constant 0 : index
    %c0_22 = arith.constant 0 : index
    %28 = vector.load %arg9[%c0_21, %c0_22] : memref<1x640xf32, #tpu.memory_space<vmem>>, vector<1x640xf32>
    %29 = vector.broadcast %28 : vector<1x640xf32> to vector<8x640xf32>
    %30 = arith.addf %27, %29 : vector<8x640xf32>
    %31 = vector.extract_strided_slice %30 {offsets = [0, 0], sizes = [8, 384], strides = [1, 1]} : vector<8x640xf32> to vector<8x384xf32>
    %32 = vector.extract_strided_slice %30 {offsets = [0, 384], sizes = [8, 128], strides = [1, 1]} : vector<8x640xf32> to vector<8x128xf32>
    %33 = vector.extract_strided_slice %30 {offsets = [0, 512], sizes = [8, 128], strides = [1, 1]} : vector<8x640xf32> to vector<8x128xf32>
    %34 = arith.mulf %3, %31 : vector<8x384xf32>
    %c0_23 = arith.constant 0 : index
    %c0_24 = arith.constant 0 : index
    %35 = vector.load %arg10[%c0_23, %c0_24] : memref<8x384xf32, #tpu.memory_space<vmem>>, vector<8x384xf32>
    tpu.vector_store %arg10[%c0_23, %c0_24], %34 {strides = array<i32>} : memref<8x384xf32, #tpu.memory_space<vmem>>, vector<8x384xf32>,
    %36 = arith.mulf %10, %32 : vector<8x128xf32>
    %37 = arith.addf %36, %33 : vector<8x128xf32>
    %c0_25 = arith.constant 0 : index
    %c0_26 = arith.constant 0 : index
    %38 = vector.load %arg11[%c0_25, %c0_26] : memref<8x128xf32, #tpu.memory_space<vmem>>, vector<8x128xf32>
    tpu.vector_store %arg11[%c0_25, %c0_26], %37 {strides = array<i32>} : memref<8x128xf32, #tpu.memory_space<vmem>>, vector<8x128xf32>,
    return
  }
  func.func @transform_0(%arg0: i32) -> (i32, i32) {
    %c0_i32 = arith.constant 0 : i32
    %c0_i32_0 = arith.constant 0 : i32
    return %arg0, %c0_i32 : i32, i32
  }
  func.func @transform_1(%arg0: i32) -> (i32, i32) {
    %c0_i32 = arith.constant 0 : i32
    %c0_i32_0 = arith.constant 0 : i32
    return %arg0, %c0_i32 : i32, i32
  }
  func.func @transform_2(%arg0: i32) -> (i32, i32) {
    %c0_i32 = arith.constant 0 : i32
    %c0_i32_0 = arith.constant 0 : i32
    %c0_i32_1 = arith.constant 0 : i32
    return %c0_i32, %c0_i32_0 : i32, i32
  }
  func.func @transform_3(%arg0: i32) -> (i32, i32) {
    %c0_i32 = arith.constant 0 : i32
    %c0_i32_0 = arith.constant 0 : i32
    %c0_i32_1 = arith.constant 0 : i32
    return %c0_i32, %c0_i32_0 : i32, i32
  }
  func.func @transform_4(%arg0: i32) -> (i32, i32) {
    %c0_i32 = arith.constant 0 : i32
    %c0_i32_0 = arith.constant 0 : i32
    %c0_i32_1 = arith.constant 0 : i32
    return %c0_i32, %c0_i32_0 : i32, i32
  }
  func.func @transform_5(%arg0: i32) -> (i32, i32) {
    %c0_i32 = arith.constant 0 : i32
    %c0_i32_0 = arith.constant 0 : i32
    %c0_i32_1 = arith.constant 0 : i32
    return %c0_i32, %c0_i32_0 : i32, i32
  }
  func.func @transform_6(%arg0: i32) -> (i32, i32) {
    %c0_i32 = arith.constant 0 : i32
    %c0_i32_0 = arith.constant 0 : i32
    %c0_i32_1 = arith.constant 0 : i32
    return %c0_i32, %c0_i32_0 : i32, i32
  }
  func.func @transform_7(%arg0: i32) -> (i32, i32) {
    %c0_i32 = arith.constant 0 : i32
    %c0_i32_0 = arith.constant 0 : i32
    %c0_i32_1 = arith.constant 0 : i32
    return %c0_i32, %c0_i32_0 : i32, i32
  }
  func.func @transform_8(%arg0: i32) -> (i32, i32) {
    %c0_i32 = arith.constant 0 : i32
    %c0_i32_0 = arith.constant 0 : i32
    %c0_i32_1 = arith.constant 0 : i32
    return %c0_i32, %c0_i32_0 : i32, i32
  }
  func.func @transform_9(%arg0: i32) -> (i32, i32) {
    %c0_i32 = arith.constant 0 : i32
    %c0_i32_0 = arith.constant 0 : i32
    return %arg0, %c0_i32 : i32, i32
  }
  func.func @transform_10(%arg0: i32) -> (i32, i32) {
    %c0_i32 = arith.constant 0 : i32
    %c0_i32_0 = arith.constant 0 : i32
    return %arg0, %c0_i32 : i32, i32
  }
}

</mosaic_0001>

<llo_original>
// kernel: tpu_custom_call.1
$region0: #{tpu_custom_call.1}
  #allocation0 [shape = 'u32[]', space=smem, size = 0x4, offset = 0x4, fixed_abs, tag = 'smem constant byte address 0x4 - core index']
  #allocation1 [shape = 'u32[144,128]{1,0:T(1,128)}', space=vmem, size = 0x12000, scoped, tag = 'internal scratch']
  %s0 = inlined_call_operand.hbm [shape: f32[16,384], index: 0, kind: input, shape index: {}]
  %s1 = inlined_call_operand.hbm [shape: f32[16,128], index: 1, kind: input, shape index: {}]
  %s2 = inlined_call_operand.hbm [shape: f32[384,768], index: 2, kind: input, shape index: {}]
  %s3 = inlined_call_operand.hbm [shape: f32[384,128], index: 3, kind: input, shape index: {}]
  %s4 = inlined_call_operand.hbm [shape: f32[128,128], index: 4, kind: input, shape index: {}]
  %s5 = inlined_call_operand.hbm [shape: f32[128,128], index: 5, kind: input, shape index: {}]
  %s6 = inlined_call_operand.hbm [shape: f32[1,128], index: 6, kind: input, shape index: {}]
  %s7 = inlined_call_operand.hbm [shape: f32[128,640], index: 7, kind: input, shape index: {}]
  %s8 = inlined_call_operand.hbm [shape: f32[1,640], index: 8, kind: input, shape index: {}]
  %s9 = inlined_call_operand.hbm [shape: f32[16,384], index: 9, kind: output, shape index: {0}]
  %s10 = inlined_call_operand.hbm [shape: f32[16,128], index: 10, kind: output, shape index: {1}]
  %11 = xla_tuple %s9, %s10
  %s12 = sld [smem:[#allocation0]]
  $region113: #{tpu_custom_call.1} parent=0
    _
  %s14 = ssub.s32 1, %s12
  %s15 = scalar_select 0, %s14, %s12
  $region1: #{tpu_custom_call.1} parent=0
    #allocation2 [shape = 'u8[24576]{0}', space=vmem, size = 0x6000, scoped, tag = 'input window, operand 0']
    #allocation3 [shape = 's32[2]{0}', space=sflag, size = 0x8, scoped, tag = 'scoped memory for tpu_custom_call.1']
    #allocation4 [shape = 's32[2]{0}', space=sflag, size = 0x8, scoped, tag = 'scoped memory for tpu_custom_call.1']
    #allocation5 [shape = 'u8[8192]{0}', space=vmem, size = 0x2000, scoped, tag = 'input window, operand 1']
    #allocation6 [shape = 's32[2]{0}', space=sflag, size = 0x8, scoped, tag = 'scoped memory for tpu_custom_call.1']
    #allocation7 [shape = 'u8[1179648]{0}', space=vmem, size = 0x120000, scoped, tag = 'input window, operand 2, single buffered']
    #allocation8 [shape = 'u8[196608]{0}', space=vmem, size = 0x30000, scoped, tag = 'input window, operand 3, single buffered']
    #allocation9 [shape = 's32[1]{0}', space=sflag, size = 0x4, scoped, tag = 'scoped memory for tpu_custom_call.1']
    #allocation10 [shape = 'u8[65536]{0}', space=vmem, size = 0x10000, scoped, tag = 'input window, operand 4, single buffered']
    #allocation11 [shape = 'u8[65536]{0}', space=vmem, size = 0x10000, scoped, tag = 'input window, operand 5, single buffered']
    #allocation12 [shape = 's32[1]{0}', space=sflag, size = 0x4, scoped, tag = 'scoped memory for tpu_custom_call.1']
    #allocation13 [shape = 'u8[512]{0}', space=vmem, size = 0x400, scoped, tag = 'input window, operand 6, single buffered']
    #allocation14 [shape = 'u8[327680]{0}', space=vmem, size = 0x50000, scoped, tag = 'input window, operand 7, single buffered']
    #allocation15 [shape = 's32[1]{0}', space=sflag, size = 0x4, scoped, tag = 'scoped memory for tpu_custom_call.1']
    #allocation16 [shape = 'u8[2560]{0}', space=vmem, size = 0xc00, scoped, tag = 'input window, operand 8, single buffered']
    #allocation17 [shape = 'u8[24576]{0}', space=vmem, size = 0x6000, scoped, tag = 'output window, operand 0']
    #allocation18 [shape = 'u8[8192]{0}', space=vmem, size = 0x2000, scoped, tag = 'output window, operand 1']
    #allocation19 [shape = 's32[2]{0}', space=sflag, size = 0x8, scoped, tag = 'scoped memory for tpu_custom_call.1']
    %16 = vsyncpa [#allocation3], 0
    %s17 = scalar_lea.sflag [#allocation3], 1
    %18 = vsyncpa %s17, 0
    %19 = vsyncpa [#allocation6], 0
    %s20 = scalar_lea.sflag [#allocation6], 1
    %21 = vsyncpa %s20, 0
    %22 = vsyncpa [#allocation9], 0
    %23 = vsyncpa [#allocation12], 0
    %24 = vsyncpa [#allocation15], 0
    %25 = vsyncpa [#allocation4], 0
    %s26 = scalar_lea.sflag [#allocation4], 1
    %27 = vsyncpa %s26, 0
    %28 = vsyncpa [#allocation19], 0
    %s29 = scalar_lea.sflag [#allocation19], 1
    %30 = vsyncpa %s29, 0
    loop: start=0, step=1, limit=4
    $region2: #{tpu_custom_call.1} parent=1 // loop_pre_header
      _
    $region3: #{tpu_custom_call.1} parent=1 // loop_header
      %s32 = sphi 0, %s36
      %p33 = scmp.ge.s32.totalorder %s32, 4
      %s42 = sphi 0, %s44
      %s45 = sphi 0, %s42
      %s46 = sphi 0, %s45
      %s62 = sphi 0, %s46
      %s68 = sphi 0, %s70
      %s71 = sphi 0, %s68
      %s72 = sphi 0, %s71
      %s88 = sphi 0, %s72
      %s92 = sphi 0, %s92
      %s94 = sphi 0, %s92
      %s95 = sphi 0, %s94
      %s109 = sphi 0, %s95
      %s113 = sphi 0, %s113
      %s115 = sphi 0, %s113
      %s116 = sphi 0, %s115
      %s130 = sphi 0, %s116
      %s134 = sphi 0, %s134
      %s136 = sphi 0, %s134
      %s137 = sphi 0, %s136
      %s151 = sphi 0, %s137
      %s155 = sphi 0, %s155
      %s157 = sphi 0, %s155
      %s158 = sphi 0, %s157
      %s172 = sphi 0, %s158
      %s176 = sphi 0, %s176
      %s178 = sphi 0, %s176
      %s179 = sphi 0, %s178
      %s193 = sphi 0, %s179
      %s197 = sphi 0, %s197
      %s199 = sphi 0, %s197
      %s200 = sphi 0, %s199
      %s214 = sphi 0, %s200
      %s218 = sphi 0, %s218
      %s220 = sphi 0, %s218
      %s221 = sphi 0, %s220
      %s235 = sphi 0, %s221
      %s241 = sphi 0, %s243
      %s244 = sphi 0, %s241
      %s245 = sphi 0, %s244
      %s261 = sphi 0, %s245
      %s267 = sphi 0, %s269
      %s270 = sphi 0, %s267
      %s271 = sphi 0, %s270
      %s287 = sphi 0, %s271
    $region4: #{tpu_custom_call.1} parent=1 // loop_header_branch
      %35 = sbr.rel (%p33) target = $region8
    $region5: #{tpu_custom_call.1} parent=1 // loop_body
      %s37 = ssub.s32 %s32, 1
      %s38 = ssub.s32 %s32, 2
      %s39 = sadd.s32 %s32, 1
      %s40 = ssub.s32 %s32, %s39
      %p41 = scmp.eq.s32.totalorder %s40, 0
      %s43 = sadd.s32 %s42, 1
      %s44 = scalar_select %p41, %s42, %s43
      %p47 = pneg %p41
      %p48 = scmp.eq.s32.totalorder %s32, 1
      %p49 = por %p47, %p48
      %p50 = scmp.ne.s32.totalorder %s42, %s45
      %p51 = scmp.eq.s32.totalorder %s32, 0
      %p52 = por %p50, %p51
      %p53 = scmp.ne.s32.totalorder %s42, %s45
      %p54 = scmp.eq.s32.totalorder %s37, 1
      %p55 = por %p53, %p54
      %p56 = scmp.ne.s32.totalorder %s45, %s46
      %p57 = scmp.eq.s32.totalorder %s37, 0
      %p58 = por %p56, %p57
      %p59 = scmp.ne.s32.totalorder %s45, %s46
      %p60 = scmp.eq.s32.totalorder %s38, 1
      %p61 = por %p59, %p60
      %p63 = scmp.ne.s32.totalorder %s46, %s62
      %p64 = scmp.eq.s32.totalorder %s38, 0
      %p65 = por %p63, %p64
      %s66 = ssub.s32 %s32, %s39
      %p67 = scmp.eq.s32.totalorder %s66, 0
      %s69 = sadd.s32 %s68, 1
      %s70 = scalar_select %p67, %s68, %s69
      %p73 = pneg %p67
      %p74 = scmp.eq.s32.totalorder %s32, 1
      %p75 = por %p73, %p74
      %p76 = scmp.ne.s32.totalorder %s68, %s71
      %p77 = scmp.eq.s32.totalorder %s32, 0
      %p78 = por %p76, %p77
      %p79 = scmp.ne.s32.totalorder %s68, %s71
      %p80 = scmp.eq.s32.totalorder %s37, 1
      %p81 = por %p79, %p80
      %p82 = scmp.ne.s32.totalorder %s71, %s72
      %p83 = scmp.eq.s32.totalorder %s37, 0
      %p84 = por %p82, %p83
      %p85 = scmp.ne.s32.totalorder %s71, %s72
      %p86 = scmp.eq.s32.totalorder %s38, 1
      %p87 = por %p85, %p86
      %p89 = scmp.ne.s32.totalorder %s72, %s88
      %p90 = scmp.eq.s32.totalorder %s38, 0
      %p91 = por %p89, %p90
      %s93 = sadd.s32 %s92, 1
      %p96 = scmp.eq.s32.totalorder %s32, 1
      %p97 = scmp.ne.s32.totalorder %s92, %s94
      %p98 = scmp.eq.s32.totalorder %s32, 0
      %p99 = por %p97, %p98
      %p100 = scmp.ne.s32.totalorder %s92, %s94
      %p101 = scmp.eq.s32.totalorder %s37, 1
      %p102 = por %p100, %p101
      %p103 = scmp.ne.s32.totalorder %s94, %s95
      %p104 = scmp.eq.s32.totalorder %s37, 0
      %p105 = por %p103, %p104
      %p106 = scmp.ne.s32.totalorder %s94, %s95
      %p107 = scmp.eq.s32.totalorder %s38, 1
      %p108 = por %p106, %p107
      %p110 = scmp.ne.s32.totalorder %s95, %s109
      %p111 = scmp.eq.s32.totalorder %s38, 0
      %p112 = por %p110, %p111
      %s114 = sadd.s32 %s113, 1
      %p117 = scmp.eq.s32.totalorder %s32, 1
      %p118 = scmp.ne.s32.totalorder %s113, %s115
      %p119 = scmp.eq.s32.totalorder %s32, 0
      %p120 = por %p118, %p119
      %p121 = scmp.ne.s32.totalorder %s113, %s115
      %p122 = scmp.eq.s32.totalorder %s37, 1
      %p123 = por %p121, %p122
      %p124 = scmp.ne.s32.totalorder %s115, %s116
      %p125 = scmp.eq.s32.totalorder %s37, 0
      %p126 = por %p124, %p125
      %p127 = scmp.ne.s32.totalorder %s115, %s116
      %p128 = scmp.eq.s32.totalorder %s38, 1
      %p129 = por %p127, %p128
      %p131 = scmp.ne.s32.totalorder %s116, %s130
      %p132 = scmp.eq.s32.totalorder %s38, 0
      %p133 = por %p131, %p132
      %s135 = sadd.s32 %s134, 1
      %p138 = scmp.eq.s32.totalorder %s32, 1
      %p139 = scmp.ne.s32.totalorder %s134, %s136
      %p140 = scmp.eq.s32.totalorder %s32, 0
      %p141 = por %p139, %p140
      %p142 = scmp.ne.s32.totalorder %s134, %s136
      %p143 = scmp.eq.s32.totalorder %s37, 1
      %p144 = por %p142, %p143
      %p145 = scmp.ne.s32.totalorder %s136, %s137
      %p146 = scmp.eq.s32.totalorder %s37, 0
      %p147 = por %p145, %p146
      %p148 = scmp.ne.s32.totalorder %s136, %s137
      %p149 = scmp.eq.s32.totalorder %s38, 1
      %p150 = por %p148, %p149
      %p152 = scmp.ne.s32.totalorder %s137, %s151
      %p153 = scmp.eq.s32.totalorder %s38, 0
      %p154 = por %p152, %p153
      %s156 = sadd.s32 %s155, 1
      %p159 = scmp.eq.s32.totalorder %s32, 1
      %p160 = scmp.ne.s32.totalorder %s155, %s157
      %p161 = scmp.eq.s32.totalorder %s32, 0
      %p162 = por %p160, %p161
      %p163 = scmp.ne.s32.totalorder %s155, %s157
      %p164 = scmp.eq.s32.totalorder %s37, 1
      %p165 = por %p163, %p164
      %p166 = scmp.ne.s32.totalorder %s157, %s158
      %p167 = scmp.eq.s32.totalorder %s37, 0
      %p168 = por %p166, %p167
      %p169 = scmp.ne.s32.totalorder %s157, %s158
      %p170 = scmp.eq.s32.totalorder %s38, 1
      %p171 = por %p169, %p170
      %p173 = scmp.ne.s32.totalorder %s158, %s172
      %p174 = scmp.eq.s32.totalorder %s38, 0
      %p175 = por %p173, %p174
      %s177 = sadd.s32 %s176, 1
      %p180 = scmp.eq.s32.totalorder %s32, 1
      %p181 = scmp.ne.s32.totalorder %s176, %s178
      %p182 = scmp.eq.s32.totalorder %s32, 0
      %p183 = por %p181, %p182
      %p184 = scmp.ne.s32.totalorder %s176, %s178
      %p185 = scmp.eq.s32.totalorder %s37, 1
      %p186 = por %p184, %p185
      %p187 = scmp.ne.s32.totalorder %s178, %s179
      %p188 = scmp.eq.s32.totalorder %s37, 0
      %p189 = por %p187, %p188
      %p190 = scmp.ne.s32.totalorder %s178, %s179
      %p191 = scmp.eq.s32.totalorder %s38, 1
      %p192 = por %p190, %p191
      %p194 = scmp.ne.s32.totalorder %s179, %s193
      %p195 = scmp.eq.s32.totalorder %s38, 0
      %p196 = por %p194, %p195
      %s198 = sadd.s32 %s197, 1
      %p201 = scmp.eq.s32.totalorder %s32, 1
      %p202 = scmp.ne.s32.totalorder %s197, %s199
      %p203 = scmp.eq.s32.totalorder %s32, 0
      %p204 = por %p202, %p203
      %p205 = scmp.ne.s32.totalorder %s197, %s199
      %p206 = scmp.eq.s32.totalorder %s37, 1
      %p207 = por %p205, %p206
      %p208 = scmp.ne.s32.totalorder %s199, %s200
      %p209 = scmp.eq.s32.totalorder %s37, 0
      %p210 = por %p208, %p209
      %p211 = scmp.ne.s32.totalorder %s199, %s200
      %p212 = scmp.eq.s32.totalorder %s38, 1
      %p213 = por %p211, %p212
      %p215 = scmp.ne.s32.totalorder %s200, %s214
      %p216 = scmp.eq.s32.totalorder %s38, 0
      %p217 = por %p215, %p216
      %s219 = sadd.s32 %s218, 1
      %p222 = scmp.eq.s32.totalorder %s32, 1
      %p223 = scmp.ne.s32.totalorder %s218, %s220
      %p224 = scmp.eq.s32.totalorder %s32, 0
      %p225 = por %p223, %p224
      %p226 = scmp.ne.s32.totalorder %s218, %s220
      %p227 = scmp.eq.s32.totalorder %s37, 1
      %p228 = por %p226, %p227
      %p229 = scmp.ne.s32.totalorder %s220, %s221
      %p230 = scmp.eq.s32.totalorder %s37, 0
      %p231 = por %p229, %p230
      %p232 = scmp.ne.s32.totalorder %s220, %s221
      %p233 = scmp.eq.s32.totalorder %s38, 1
      %p234 = por %p232, %p233
      %p236 = scmp.ne.s32.totalorder %s221, %s235
      %p237 = scmp.eq.s32.totalorder %s38, 0
      %p238 = por %p236, %p237
      %s239 = ssub.s32 %s32, %s39
      %p240 = scmp.eq.s32.totalorder %s239, 0
      %s242 = sadd.s32 %s241, 1
      %s243 = scalar_select %p240, %s241, %s242
      %p246 = pneg %p240
      %p247 = scmp.eq.s32.totalorder %s32, 1
      %p248 = por %p246, %p247
      %p249 = scmp.ne.s32.totalorder %s241, %s244
      %p250 = scmp.eq.s32.totalorder %s32, 0
      %p251 = por %p249, %p250
      %p252 = scmp.ne.s32.totalorder %s241, %s244
      %p253 = scmp.eq.s32.totalorder %s37, 1
      %p254 = por %p252, %p253
      %p255 = scmp.ne.s32.totalorder %s244, %s245
      %p256 = scmp.eq.s32.totalorder %s37, 0
      %p257 = por %p255, %p256
      %p258 = scmp.ne.s32.totalorder %s244, %s245
      %p259 = scmp.eq.s32.totalorder %s38, 1
      %p260 = por %p258, %p259
      %p262 = scmp.ne.s32.totalorder %s245, %s261
      %p263 = scmp.eq.s32.totalorder %s38, 0
      %p264 = por %p262, %p263
      %s265 = ssub.s32 %s32, %s39
      %p266 = scmp.eq.s32.totalorder %s265, 0
      %s268 = sadd.s32 %s267, 1
      %s269 = scalar_select %p266, %s267, %s268
      %p272 = pneg %p266
      %p273 = scmp.eq.s32.totalorder %s32, 1
      %p274 = por %p272, %p273
      %p275 = scmp.ne.s32.totalorder %s267, %s270
      %p276 = scmp.eq.s32.totalorder %s32, 0
      %p277 = por %p275, %p276
      %p278 = scmp.ne.s32.totalorder %s267, %s270
      %p279 = scmp.eq.s32.totalorder %s37, 1
      %p280 = por %p278, %p279
      %p281 = scmp.ne.s32.totalorder %s270, %s271
      %p282 = scmp.eq.s32.totalorder %s37, 0
      %p283 = por %p281, %p282
      %p284 = scmp.ne.s32.totalorder %s270, %s271
      %p285 = scmp.eq.s32.totalorder %s38, 1
      %p286 = por %p284, %p285
      %p288 = scmp.ne.s32.totalorder %s271, %s287
      %p289 = scmp.eq.s32.totalorder %s38, 0
      %p290 = por %p288, %p289
      %p291 = scmp.le.s32.totalorder 1, %s32
      %p292 = scmp.lt.s32.totalorder %s32, 3
      %p293 = pnand %p291, %p292
      %p294 = pneg %p293
      // Predicated region
      $region9: #{tpu_custom_call.1} parent=5 // pred_check
        _
      $region10: #{tpu_custom_call.1} parent=5 // pred_check_branch
        %296 = sbr.rel (%p293) target = $region12
      $region11: #{tpu_custom_call.1} parent=5 // pred_region
        %s297 = ssub.s32 %s32, 1
        // Predicated region
        $region13: #{tpu_custom_call.1} parent=11 // pred_check
          %p298 = pneg %p105
        $region14: #{tpu_custom_call.1} parent=11 // pred_check_branch
          %300 = sbr.rel (%p298) target = $region16
        $region15: #{tpu_custom_call.1} parent=11 // pred_region
          %s302 = ssub.s32 36864, 36864
          %303 = vsyncadd [#allocation6], %s302
          %s304 = sshll.u32 [#allocation7], 4
          %s305 = int_to_ptr.vmem [resolvable:$true] %s304
          %310 = dma.hbm_to_vmem [thread:$0]  %s2, 36864, %s305, [#allocation6], 768, 768, 48
        $region16: #{tpu_custom_call.1} parent=11 // pred_fallthru
          _
        // Predicated region
        $region17: #{tpu_custom_call.1} parent=11 // pred_check
          %p311 = pneg %p126
        $region18: #{tpu_custom_call.1} parent=11 // pred_check_branch
          %313 = sbr.rel (%p311) target = $region20
        $region19: #{tpu_custom_call.1} parent=11 // pred_region
          %s315 = ssub.s32 6144, 6144
          %316 = vsyncadd [#allocation9], %s315
          %s317 = sshll.u32 [#allocation8], 4
          %s318 = int_to_ptr.vmem [resolvable:$true] %s317
          %323 = dma.hbm_to_vmem [thread:$0]  %s3, 6144, %s318, [#allocation9], 128, 128, 8
        $region20: #{tpu_custom_call.1} parent=11 // pred_fallthru
          _
        // Predicated region
        $region21: #{tpu_custom_call.1} parent=11 // pred_check
          %p324 = pneg %p147
        $region22: #{tpu_custom_call.1} parent=11 // pred_check_branch
          %326 = sbr.rel (%p324) target = $region24
        $region23: #{tpu_custom_call.1} parent=11 // pred_region
          %s328 = ssub.s32 2048, 2048
          %329 = vsyncadd [#allocation9], %s328
          %s330 = sshll.u32 [#allocation10], 4
          %s331 = int_to_ptr.vmem [resolvable:$true] %s330
          %336 = dma.hbm_to_vmem [thread:$0]  %s4, 2048, %s331, [#allocation9], 128, 128, 8
        $region24: #{tpu_custom_call.1} parent=11 // pred_fallthru
          _
        // Predicated region
        $region25: #{tpu_custom_call.1} parent=11 // pred_check
          %p337 = pneg %p168
        $region26: #{tpu_custom_call.1} parent=11 // pred_check_branch
          %339 = sbr.rel (%p337) target = $region28
        $region27: #{tpu_custom_call.1} parent=11 // pred_region
          %s341 = ssub.s32 2048, 2048
          %342 = vsyncadd [#allocation12], %s341
          %s343 = sshll.u32 [#allocation11], 4
          %s344 = int_to_ptr.vmem [resolvable:$true] %s343
          %349 = dma.hbm_to_vmem [thread:$0]  %s5, 2048, %s344, [#allocation12], 128, 128, 8
        $region28: #{tpu_custom_call.1} parent=11 // pred_fallthru
          _
        // Predicated region
        $region29: #{tpu_custom_call.1} parent=11 // pred_check
          %p350 = pneg %p189
        $region30: #{tpu_custom_call.1} parent=11 // pred_check_branch
          %352 = sbr.rel (%p350) target = $region32
        $region31: #{tpu_custom_call.1} parent=11 // pred_region
          %s354 = ssub.s32 16, 16
          %355 = vsyncadd [#allocation12], %s354
          %s357 = sshll.u32 [#allocation13], 4
          %s358 = int_to_ptr.vmem [resolvable:$true] %s357
          %360 = dma.hbm_to_vmem [thread:$0]  %s6, 16, %s358, [#allocation12]
        $region32: #{tpu_custom_call.1} parent=11 // pred_fallthru
          _
        // Predicated region
        $region33: #{tpu_custom_call.1} parent=11 // pred_check
          %p361 = pneg %p210
        $region34: #{tpu_custom_call.1} parent=11 // pred_check_branch
          %363 = sbr.rel (%p361) target = $region36
        $region35: #{tpu_custom_call.1} parent=11 // pred_region
          %s365 = ssub.s32 10240, 10240
          %366 = vsyncadd [#allocation15], %s365
          %s367 = sshll.u32 [#allocation14], 4
          %s368 = int_to_ptr.vmem [resolvable:$true] %s367
          %373 = dma.hbm_to_vmem [thread:$0]  %s7, 10240, %s368, [#allocation15], 640, 640, 40
        $region36: #{tpu_custom_call.1} parent=11 // pred_fallthru
          _
        // Predicated region
        $region37: #{tpu_custom_call.1} parent=11 // pred_check
          %p374 = pneg %p231
        $region38: #{tpu_custom_call.1} parent=11 // pred_check_branch
          %376 = sbr.rel (%p374) target = $region40
        $region39: #{tpu_custom_call.1} parent=11 // pred_region
          %s378 = ssub.s32 80, 80
          %379 = vsyncadd [#allocation15], %s378
          %s381 = sshll.u32 [#allocation16], 4
          %s382 = int_to_ptr.vmem [resolvable:$true] %s381
          %384 = dma.hbm_to_vmem [thread:$0]  %s8, 80, %s382, [#allocation15]
        $region40: #{tpu_custom_call.1} parent=11 // pred_fallthru
          _
      $region12: #{tpu_custom_call.1} parent=5 // pred_fallthru
        _
      %p385 = scmp.lt.s32.totalorder %s32, 2
      // Predicated region
      $region41: #{tpu_custom_call.1} parent=5 // pred_check
        %p386 = pneg %p385
      $region42: #{tpu_custom_call.1} parent=5 // pred_check_branch
        %388 = sbr.rel (%p386) target = $region44
      $region43: #{tpu_custom_call.1} parent=5 // pred_region
        // Predicated region
        $region45: #{tpu_custom_call.1} parent=43 // pred_check
          %p389 = pneg %p52
        $region46: #{tpu_custom_call.1} parent=43 // pred_check_branch
          %391 = sbr.rel (%p389) target = $region48
        $region47: #{tpu_custom_call.1} parent=43 // pred_region
          %s392 = sand.u32 %s42, 1
          %s393 = scalar_lea.sflag [#allocation3], %s392
          %s394 = sand.u32 %s42, 1
          %s395 = smul.addr %s394, 24
          %s396 = scalar_lea.vmem [#allocation2], %s395
          %s398 = ssub.s32 384, 384
          %399 = vsyncadd %s393, %s398
          %s400 = smul.addr %s32, 3
          %s401 = smul.addr %s400, 128
          %s402 = scalar_lea.hbm %s0, %s401
          %s404 = sshll.u32 %s396, 4
          %s405 = int_to_ptr.vmem [resolvable:$true] %s404
          %407 = dma.hbm_to_vmem [thread:$0]  %s402, 384, %s405, %s393
        $region48: #{tpu_custom_call.1} parent=43 // pred_fallthru
          _
        // Predicated region
        $region49: #{tpu_custom_call.1} parent=43 // pred_check
          %p408 = pneg %p78
        $region50: #{tpu_custom_call.1} parent=43 // pred_check_branch
          %410 = sbr.rel (%p408) target = $region52
        $region51: #{tpu_custom_call.1} parent=43 // pred_region
          %s411 = sand.u32 %s32, 1
          %s412 = scalar_lea.sflag [#allocation6], %s411
          %s413 = sand.u32 %s68, 1
          %s414 = smul.addr %s413, 8
          %s415 = scalar_lea.vmem [#allocation5], %s414
          %s417 = ssub.s32 128, 128
          %418 = vsyncadd %s412, %s417
          %s419 = smul.addr %s32, 128
          %s420 = scalar_lea.hbm %s1, %s419
          %s422 = sshll.u32 %s415, 4
          %s423 = int_to_ptr.vmem [resolvable:$true] %s422
          %425 = dma.hbm_to_vmem [thread:$0]  %s420, 128, %s423, %s412
        $region52: #{tpu_custom_call.1} parent=43 // pred_fallthru
          _
      $region44: #{tpu_custom_call.1} parent=5 // pred_fallthru
        _
      %p426 = scmp.le.s32.totalorder 1, %s32
      %p427 = scmp.lt.s32.totalorder %s32, 3
      %p428 = pnand %p426, %p427
      %p429 = pneg %p428
      // Predicated region
      $region53: #{tpu_custom_call.1} parent=5 // pred_check
        _
      $region54: #{tpu_custom_call.1} parent=5 // pred_check_branch
        %431 = sbr.rel (%p428) target = $region56
      $region55: #{tpu_custom_call.1} parent=5 // pred_region
        %s432 = ssub.s32 %s32, 1
        %s433 = sand.u32 %s45, 1
        %s434 = scalar_lea.sflag [#allocation3], %s433
        %s435 = sand.u32 %s45, 1
        %s436 = smul.addr %s435, 24
        %s437 = scalar_lea.vmem [#allocation2], %s436
        // Predicated region
        $region57: #{tpu_custom_call.1} parent=55 // pred_check
          %p438 = pneg %p58
        $region58: #{tpu_custom_call.1} parent=55 // pred_check_branch
          %440 = sbr.rel (%p438) target = $region60
        $region59: #{tpu_custom_call.1} parent=55 // pred_region
          %441 = dma.done %s434, 384
        $region60: #{tpu_custom_call.1} parent=55 // pred_fallthru
          _
        %s442 = sand.u32 %s37, 1
        %s443 = scalar_lea.sflag [#allocation6], %s442
        %s444 = sand.u32 %s71, 1
        %s445 = smul.addr %s444, 8
        %s446 = scalar_lea.vmem [#allocation5], %s445
        // Predicated region
        $region61: #{tpu_custom_call.1} parent=55 // pred_check
          %p447 = pneg %p84
        $region62: #{tpu_custom_call.1} parent=55 // pred_check_branch
          %449 = sbr.rel (%p447) target = $region64
        $region63: #{tpu_custom_call.1} parent=55 // pred_region
          %450 = dma.done %s443, 128
        $region64: #{tpu_custom_call.1} parent=55 // pred_fallthru
          _
        // Predicated region
        $region65: #{tpu_custom_call.1} parent=55 // pred_check
          %p451 = pneg %p105
        $region66: #{tpu_custom_call.1} parent=55 // pred_check_branch
          %453 = sbr.rel (%p451) target = $region68
        $region67: #{tpu_custom_call.1} parent=55 // pred_region
          %454 = dma.done [#allocation6], 36864
        $region68: #{tpu_custom_call.1} parent=55 // pred_fallthru
          _
        // Predicated region
        $region69: #{tpu_custom_call.1} parent=55 // pred_check
          %p455 = pneg %p126
        $region70: #{tpu_custom_call.1} parent=55 // pred_check_branch
          %457 = sbr.rel (%p455) target = $region72
        $region71: #{tpu_custom_call.1} parent=55 // pred_region
          %458 = dma.done [#allocation9], 6144
        $region72: #{tpu_custom_call.1} parent=55 // pred_fallthru
          _
        // Predicated region
        $region73: #{tpu_custom_call.1} parent=55 // pred_check
          %p459 = pneg %p147
        $region74: #{tpu_custom_call.1} parent=55 // pred_check_branch
          %461 = sbr.rel (%p459) target = $region76
        $region75: #{tpu_custom_call.1} parent=55 // pred_region
          %462 = dma.done [#allocation9], 2048
        $region76: #{tpu_custom_call.1} parent=55 // pred_fallthru
          _
        // Predicated region
        $region77: #{tpu_custom_call.1} parent=55 // pred_check
          %p463 = pneg %p168
        $region78: #{tpu_custom_call.1} parent=55 // pred_check_branch
          %465 = sbr.rel (%p463) target = $region80
        $region79: #{tpu_custom_call.1} parent=55 // pred_region
          %466 = dma.done [#allocation12], 2048
        $region80: #{tpu_custom_call.1} parent=55 // pred_fallthru
          _
        // Predicated region
        $region81: #{tpu_custom_call.1} parent=55 // pred_check
          %p467 = pneg %p189
        $region82: #{tpu_custom_call.1} parent=55 // pred_check_branch
          %469 = sbr.rel (%p467) target = $region84
        $region83: #{tpu_custom_call.1} parent=55 // pred_region
          %470 = dma.done [#allocation12], 16
        $region84: #{tpu_custom_call.1} parent=55 // pred_fallthru
          _
        // Predicated region
        $region85: #{tpu_custom_call.1} parent=55 // pred_check
          %p471 = pneg %p210
        $region86: #{tpu_custom_call.1} parent=55 // pred_check_branch
          %473 = sbr.rel (%p471) target = $region88
        $region87: #{tpu_custom_call.1} parent=55 // pred_region
          %474 = dma.done [#allocation15], 10240
        $region88: #{tpu_custom_call.1} parent=55 // pred_fallthru
          _
        // Predicated region
        $region89: #{tpu_custom_call.1} parent=55 // pred_check
          %p475 = pneg %p231
        $region90: #{tpu_custom_call.1} parent=55 // pred_check_branch
          %477 = sbr.rel (%p475) target = $region92
        $region91: #{tpu_custom_call.1} parent=55 // pred_region
          %478 = dma.done [#allocation15], 80
        $region92: #{tpu_custom_call.1} parent=55 // pred_fallthru
          _
        %s479 = sand.u32 %s45, 1
        %s480 = scalar_lea.sflag [#allocation3], %s479
        %s481 = sand.u32 %s45, 1
        %s482 = smul.addr %s481, 24
        %s483 = scalar_lea.vmem [#allocation2], %s482
        %p484 = pneg %p58
        %p485 = pneg %p55
        %s486 = sand.u32 %s37, 1
        %s487 = scalar_lea.sflag [#allocation6], %s486
        %s488 = sand.u32 %s71, 1
        %s489 = smul.addr %s488, 8
        %s490 = scalar_lea.vmem [#allocation5], %s489
        %p491 = pneg %p84
        %p492 = pneg %p81
        %p493 = pneg %p105
        %p494 = pneg %p102
        %p495 = pneg %p126
        %p496 = pneg %p123
        %p497 = pneg %p147
        %p498 = pneg %p144
        %p499 = pneg %p168
        %p500 = pneg %p165
        %p501 = pneg %p189
        %p502 = pneg %p186
        %p503 = pneg %p210
        %p504 = pneg %p207
        %p505 = pneg %p231
        %p506 = pneg %p228
        %p507 = pneg %p257
        %p508 = pneg %p254
        %s509 = sand.u32 %s244, 1
        %s510 = scalar_lea.sflag [#allocation4], %s509
        %s511 = sand.u32 %s244, 1
        %s512 = smul.addr %s511, 24
        %s513 = scalar_lea.vmem [#allocation17], %s512
        %p514 = pneg %p283
        %p515 = pneg %p280
        %s516 = sand.u32 %s270, 1
        %s517 = scalar_lea.sflag [#allocation19], %s516
        %s518 = sand.u32 %s270, 1
        %s519 = smul.addr %s518, 8
        %s520 = scalar_lea.vmem [#allocation18], %s519
        %v521 = vld [vmem:[%s437] sm:$0xff]
        %v522 = vld [vmem:[%s437 + $0x8] sm:$0xff]
        %v523 = vld [vmem:[%s437 + $0x10] sm:$0xff]
        %v524 = vld [vmem:[#allocation7] sm:$0xff]
        %v525 = vld [vmem:[#allocation7 + $0x8] sm:$0xff]
        %v526 = vld [vmem:[#allocation7 + $0x10] sm:$0xff]
        %v527 = vld [vmem:[#allocation7 + $0x18] sm:$0xff]
        %v528 = vld [vmem:[#allocation7 + $0x20] sm:$0xff]
        %v529 = vld [vmem:[#allocation7 + $0x28] sm:$0xff]
        %v530 = vld [vmem:[#allocation7 + $0x30] sm:$0xff]
        %v531 = vld [vmem:[#allocation7 + $0x38] sm:$0xff]
        %v532 = vld [vmem:[#allocation7 + $0x40] sm:$0xff]
        %v533 = vld [vmem:[#allocation7 + $0x48] sm:$0xff]
        %v534 = vld [vmem:[#allocation7 + $0x50] sm:$0xff]
        %v535 = vld [vmem:[#allocation7 + $0x58] sm:$0xff]
        %v536 = vld [vmem:[#allocation7 + $0x60] sm:$0xff]
        %v537 = vld [vmem:[#allocation7 + $0x68] sm:$0xff]
        %v538 = vld [vmem:[#allocation7 + $0x70] sm:$0xff]
        %v539 = vld [vmem:[#allocation7 + $0x78] sm:$0xff]
        %v540 = vld [vmem:[#allocation7 + $0x80] sm:$0xff]
        %v541 = vld [vmem:[#allocation7 + $0x88] sm:$0xff]
        %v542 = vld [vmem:[#allocation7 + $0x90] sm:$0xff]
        %v543 = vld [vmem:[#allocation7 + $0x98] sm:$0xff]
        %v544 = vld [vmem:[#allocation7 + $0xa0] sm:$0xff]
        %v545 = vld [vmem:[#allocation7 + $0xa8] sm:$0xff]
        %v546 = vld [vmem:[#allocation7 + $0xb0] sm:$0xff]
        %v547 = vld [vmem:[#allocation7 + $0xb8] sm:$0xff]
        %v548 = vld [vmem:[#allocation7 + $0xc0] sm:$0xff]
        %v549 = vld [vmem:[#allocation7 + $0xc8] sm:$0xff]
        %v550 = vld [vmem:[#allocation7 + $0xd0] sm:$0xff]
        %v551 = vld [vmem:[#allocation7 + $0xd8] sm:$0xff]
        %v552 = vld [vmem:[#allocation7 + $0xe0] sm:$0xff]
        %v553 = vld [vmem:[#allocation7 + $0xe8] sm:$0xff]
        %v554 = vld [vmem:[#allocation7 + $0xf0] sm:$0xff]
        %v555 = vld [vmem:[#allocation7 + $0xf8] sm:$0xff]
        %v556 = vld [vmem:[#allocation7 + $0x100] sm:$0xff]
        %v557 = vld [vmem:[#allocation7 + $0x108] sm:$0xff]
        %v558 = vld [vmem:[#allocation7 + $0x110] sm:$0xff]
        %v559 = vld [vmem:[#allocation7 + $0x118] sm:$0xff]
        %v560 = vld [vmem:[#allocation7 + $0x120] sm:$0xff]
        %v561 = vld [vmem:[#allocation7 + $0x128] sm:$0xff]
        %v562 = vld [vmem:[#allocation7 + $0x130] sm:$0xff]
        %v563 = vld [vmem:[#allocation7 + $0x138] sm:$0xff]
        %v564 = vld [vmem:[#allocation7 + $0x140] sm:$0xff]
        %v565 = vld [vmem:[#allocation7 + $0x148] sm:$0xff]
        %v566 = vld [vmem:[#allocation7 + $0x150] sm:$0xff]
        %v567 = vld [vmem:[#allocation7 + $0x158] sm:$0xff]
        %v568 = vld [vmem:[#allocation7 + $0x160] sm:$0xff]
        %v569 = vld [vmem:[#allocation7 + $0x168] sm:$0xff]
        %v570 = vld [vmem:[#allocation7 + $0x170] sm:$0xff]
        %v571 = vld [vmem:[#allocation7 + $0x178] sm:$0xff]
        %v572 = vld [vmem:[#allocation7 + $0x180] sm:$0xff]
        %v573 = vld [vmem:[#allocation7 + $0x188] sm:$0xff]
        %v574 = vld [vmem:[#allocation7 + $0x190] sm:$0xff]
        %v575 = vld [vmem:[#allocation7 + $0x198] sm:$0xff]
        %v576 = vld [vmem:[#allocation7 + $0x1a0] sm:$0xff]
        %v577 = vld [vmem:[#allocation7 + $0x1a8] sm:$0xff]
        %v578 = vld [vmem:[#allocation7 + $0x1b0] sm:$0xff]
        %v579 = vld [vmem:[#allocation7 + $0x1b8] sm:$0xff]
        %v580 = vld [vmem:[#allocation7 + $0x1c0] sm:$0xff]
        %v581 = vld [vmem:[#allocation7 + $0x1c8] sm:$0xff]
        %v582 = vld [vmem:[#allocation7 + $0x1d0] sm:$0xff]
        %v583 = vld [vmem:[#allocation7 + $0x1d8] sm:$0xff]
        %v584 = vld [vmem:[#allocation7 + $0x1e0] sm:$0xff]
        %v585 = vld [vmem:[#allocation7 + $0x1e8] sm:$0xff]
        %v586 = vld [vmem:[#allocation7 + $0x1f0] sm:$0xff]
        %v587 = vld [vmem:[#allocation7 + $0x1f8] sm:$0xff]
        %v588 = vld [vmem:[#allocation7 + $0x200] sm:$0xff]
        %v589 = vld [vmem:[#allocation7 + $0x208] sm:$0xff]
        %v590 = vld [vmem:[#allocation7 + $0x210] sm:$0xff]
        %v591 = vld [vmem:[#allocation7 + $0x218] sm:$0xff]
        %v592 = vld [vmem:[#allocation7 + $0x220] sm:$0xff]
        %v593 = vld [vmem:[#allocation7 + $0x228] sm:$0xff]
        %v594 = vld [vmem:[#allocation7 + $0x230] sm:$0xff]
        %v595 = vld [vmem:[#allocation7 + $0x238] sm:$0xff]
        %v596 = vld [vmem:[#allocation7 + $0x240] sm:$0xff]
        %v597 = vld [vmem:[#allocation7 + $0x248] sm:$0xff]
        %v598 = vld [vmem:[#allocation7 + $0x250] sm:$0xff]
        %v599 = vld [vmem:[#allocation7 + $0x258] sm:$0xff]
        %v600 = vld [vmem:[#allocation7 + $0x260] sm:$0xff]
        %v601 = vld [vmem:[#allocation7 + $0x268] sm:$0xff]
        %v602 = vld [vmem:[#allocation7 + $0x270] sm:$0xff]
        %v603 = vld [vmem:[#allocation7 + $0x278] sm:$0xff]
        %v604 = vld [vmem:[#allocation7 + $0x280] sm:$0xff]
        %v605 = vld [vmem:[#allocation7 + $0x288] sm:$0xff]
        %v606 = vld [vmem:[#allocation7 + $0x290] sm:$0xff]
        %v607 = vld [vmem:[#allocation7 + $0x298] sm:$0xff]
        %v608 = vld [vmem:[#allocation7 + $0x2a0] sm:$0xff]
        %v609 = vld [vmem:[#allocation7 + $0x2a8] sm:$0xff]
        %v610 = vld [vmem:[#allocation7 + $0x2b0] sm:$0xff]
        %v611 = vld [vmem:[#allocation7 + $0x2b8] sm:$0xff]
        %v612 = vld [vmem:[#allocation7 + $0x2c0] sm:$0xff]
        %v613 = vld [vmem:[#allocation7 + $0x2c8] sm:$0xff]
        %v614 = vld [vmem:[#allocation7 + $0x2d0] sm:$0xff]
        %v615 = vld [vmem:[#allocation7 + $0x2d8] sm:$0xff]
        %v616 = vld [vmem:[#allocation7 + $0x2e0] sm:$0xff]
        %v617 = vld [vmem:[#allocation7 + $0x2e8] sm:$0xff]
        %v618 = vld [vmem:[#allocation7 + $0x2f0] sm:$0xff]
        %v619 = vld [vmem:[#allocation7 + $0x2f8] sm:$0xff]
        %v620 = vld [vmem:[#allocation7 + $0x300] sm:$0xff]
        %v621 = vld [vmem:[#allocation7 + $0x308] sm:$0xff]
        %v622 = vld [vmem:[#allocation7 + $0x310] sm:$0xff]
        %v623 = vld [vmem:[#allocation7 + $0x318] sm:$0xff]
        %v624 = vld [vmem:[#allocation7 + $0x320] sm:$0xff]
        %v625 = vld [vmem:[#allocation7 + $0x328] sm:$0xff]
        %v626 = vld [vmem:[#allocation7 + $0x330] sm:$0xff]
        %v627 = vld [vmem:[#allocation7 + $0x338] sm:$0xff]
        %v628 = vld [vmem:[#allocation7 + $0x340] sm:$0xff]
        %v629 = vld [vmem:[#allocation7 + $0x348] sm:$0xff]
        %v630 = vld [vmem:[#allocation7 + $0x350] sm:$0xff]
        %v631 = vld [vmem:[#allocation7 + $0x358] sm:$0xff]
        %v632 = vld [vmem:[#allocation7 + $0x360] sm:$0xff]
        %v633 = vld [vmem:[#allocation7 + $0x368] sm:$0xff]
        %v634 = vld [vmem:[#allocation7 + $0x370] sm:$0xff]
        %v635 = vld [vmem:[#allocation7 + $0x378] sm:$0xff]
        %v636 = vld [vmem:[#allocation7 + $0x380] sm:$0xff]
        %v637 = vld [vmem:[#allocation7 + $0x388] sm:$0xff]
        %v638 = vld [vmem:[#allocation7 + $0x390] sm:$0xff]
        %v639 = vld [vmem:[#allocation7 + $0x398] sm:$0xff]
        %v640 = vld [vmem:[#allocation7 + $0x3a0] sm:$0xff]
        %v641 = vld [vmem:[#allocation7 + $0x3a8] sm:$0xff]
        %v642 = vld [vmem:[#allocation7 + $0x3b0] sm:$0xff]
        %v643 = vld [vmem:[#allocation7 + $0x3b8] sm:$0xff]
        %v644 = vld [vmem:[#allocation7 + $0x3c0] sm:$0xff]
        %v645 = vld [vmem:[#allocation7 + $0x3c8] sm:$0xff]
        %v646 = vld [vmem:[#allocation7 + $0x3d0] sm:$0xff]
        %v647 = vld [vmem:[#allocation7 + $0x3d8] sm:$0xff]
        %v648 = vld [vmem:[#allocation7 + $0x3e0] sm:$0xff]
        %v649 = vld [vmem:[#allocation7 + $0x3e8] sm:$0xff]
        %v650 = vld [vmem:[#allocation7 + $0x3f0] sm:$0xff]
        %v651 = vld [vmem:[#allocation7 + $0x3f8] sm:$0xff]
        %v652 = vld [vmem:[#allocation7 + $0x400] sm:$0xff]
        %v653 = vld [vmem:[#allocation7 + $0x408] sm:$0xff]
        %v654 = vld [vmem:[#allocation7 + $0x410] sm:$0xff]
        %v655 = vld [vmem:[#allocation7 + $0x418] sm:$0xff]
        %v656 = vld [vmem:[#allocation7 + $0x420] sm:$0xff]
        %v657 = vld [vmem:[#allocation7 + $0x428] sm:$0xff]
        %v658 = vld [vmem:[#allocation7 + $0x430] sm:$0xff]
        %v659 = vld [vmem:[#allocation7 + $0x438] sm:$0xff]
        %v660 = vld [vmem:[#allocation7 + $0x440] sm:$0xff]
        %v661 = vld [vmem:[#allocation7 + $0x448] sm:$0xff]
        %v662 = vld [vmem:[#allocation7 + $0x450] sm:$0xff]
        %v663 = vld [vmem:[#allocation7 + $0x458] sm:$0xff]
        %v664 = vld [vmem:[#allocation7 + $0x460] sm:$0xff]
        %v665 = vld [vmem:[#allocation7 + $0x468] sm:$0xff]
        %v666 = vld [vmem:[#allocation7 + $0x470] sm:$0xff]
        %v667 = vld [vmem:[#allocation7 + $0x478] sm:$0xff]
        %v668 = vld [vmem:[#allocation7 + $0x480] sm:$0xff]
        %v669 = vld [vmem:[#allocation7 + $0x488] sm:$0xff]
        %v670 = vld [vmem:[#allocation7 + $0x490] sm:$0xff]
        %v671 = vld [vmem:[#allocation7 + $0x498] sm:$0xff]
        %v672 = vld [vmem:[#allocation7 + $0x4a0] sm:$0xff]
        %v673 = vld [vmem:[#allocation7 + $0x4a8] sm:$0xff]
        %v674 = vld [vmem:[#allocation7 + $0x4b0] sm:$0xff]
        %v675 = vld [vmem:[#allocation7 + $0x4b8] sm:$0xff]
        %v676 = vld [vmem:[#allocation7 + $0x4c0] sm:$0xff]
        %v677 = vld [vmem:[#allocation7 + $0x4c8] sm:$0xff]
        %v678 = vld [vmem:[#allocation7 + $0x4d0] sm:$0xff]
        %v679 = vld [vmem:[#allocation7 + $0x4d8] sm:$0xff]
        %v680 = vld [vmem:[#allocation7 + $0x4e0] sm:$0xff]
        %v681 = vld [vmem:[#allocation7 + $0x4e8] sm:$0xff]
        %v682 = vld [vmem:[#allocation7 + $0x4f0] sm:$0xff]
        %v683 = vld [vmem:[#allocation7 + $0x4f8] sm:$0xff]
        %v684 = vld [vmem:[#allocation7 + $0x500] sm:$0xff]
        %v685 = vld [vmem:[#allocation7 + $0x508] sm:$0xff]
        %v686 = vld [vmem:[#allocation7 + $0x510] sm:$0xff]
        %v687 = vld [vmem:[#allocation7 + $0x518] sm:$0xff]
        %v688 = vld [vmem:[#allocation7 + $0x520] sm:$0xff]
        %v689 = vld [vmem:[#allocation7 + $0x528] sm:$0xff]
        %v690 = vld [vmem:[#allocation7 + $0x530] sm:$0xff]
        %v691 = vld [vmem:[#allocation7 + $0x538] sm:$0xff]
        %v692 = vld [vmem:[#allocation7 + $0x540] sm:$0xff]
        %v693 = vld [vmem:[#allocation7 + $0x548] sm:$0xff]
        %v694 = vld [vmem:[#allocation7 + $0x550] sm:$0xff]
        %v695 = vld [vmem:[#allocation7 + $0x558] sm:$0xff]
        %v696 = vld [vmem:[#allocation7 + $0x560] sm:$0xff]
        %v697 = vld [vmem:[#allocation7 + $0x568] sm:$0xff]
        %v698 = vld [vmem:[#allocation7 + $0x570] sm:$0xff]
        %v699 = vld [vmem:[#allocation7 + $0x578] sm:$0xff]
        %v700 = vld [vmem:[#allocation7 + $0x580] sm:$0xff]
        %v701 = vld [vmem:[#allocation7 + $0x588] sm:$0xff]
        %v702 = vld [vmem:[#allocation7 + $0x590] sm:$0xff]
        %v703 = vld [vmem:[#allocation7 + $0x598] sm:$0xff]
        %v704 = vld [vmem:[#allocation7 + $0x5a0] sm:$0xff]
        %v705 = vld [vmem:[#allocation7 + $0x5a8] sm:$0xff]
        %v706 = vld [vmem:[#allocation7 + $0x5b0] sm:$0xff]
        %v707 = vld [vmem:[#allocation7 + $0x5b8] sm:$0xff]
        %v708 = vld [vmem:[#allocation7 + $0x5c0] sm:$0xff]
        %v709 = vld [vmem:[#allocation7 + $0x5c8] sm:$0xff]
        %v710 = vld [vmem:[#allocation7 + $0x5d0] sm:$0xff]
        %v711 = vld [vmem:[#allocation7 + $0x5d8] sm:$0xff]
        %v712 = vld [vmem:[#allocation7 + $0x5e0] sm:$0xff]
        %v713 = vld [vmem:[#allocation7 + $0x5e8] sm:$0xff]
        %v714 = vld [vmem:[#allocation7 + $0x5f0] sm:$0xff]
        %v715 = vld [vmem:[#allocation7 + $0x5f8] sm:$0xff]
        %v716 = vld [vmem:[#allocation7 + $0x600] sm:$0xff]
        %v717 = vld [vmem:[#allocation7 + $0x608] sm:$0xff]
        %v718 = vld [vmem:[#allocation7 + $0x610] sm:$0xff]
        %v719 = vld [vmem:[#allocation7 + $0x618] sm:$0xff]
        %v720 = vld [vmem:[#allocation7 + $0x620] sm:$0xff]
        %v721 = vld [vmem:[#allocation7 + $0x628] sm:$0xff]
        %v722 = vld [vmem:[#allocation7 + $0x630] sm:$0xff]
        %v723 = vld [vmem:[#allocation7 + $0x638] sm:$0xff]
        %v724 = vld [vmem:[#allocation7 + $0x640] sm:$0xff]
        %v725 = vld [vmem:[#allocation7 + $0x648] sm:$0xff]
        %v726 = vld [vmem:[#allocation7 + $0x650] sm:$0xff]
        %v727 = vld [vmem:[#allocation7 + $0x658] sm:$0xff]
        %v728 = vld [vmem:[#allocation7 + $0x660] sm:$0xff]
        %v729 = vld [vmem:[#allocation7 + $0x668] sm:$0xff]
        %v730 = vld [vmem:[#allocation7 + $0x670] sm:$0xff]
        %v731 = vld [vmem:[#allocation7 + $0x678] sm:$0xff]
        %v732 = vld [vmem:[#allocation7 + $0x680] sm:$0xff]
        %v733 = vld [vmem:[#allocation7 + $0x688] sm:$0xff]
        %v734 = vld [vmem:[#allocation7 + $0x690] sm:$0xff]
        %v735 = vld [vmem:[#allocation7 + $0x698] sm:$0xff]
        %v736 = vld [vmem:[#allocation7 + $0x6a0] sm:$0xff]
        %v737 = vld [vmem:[#allocation7 + $0x6a8] sm:$0xff]
        %v738 = vld [vmem:[#allocation7 + $0x6b0] sm:$0xff]
        %v739 = vld [vmem:[#allocation7 + $0x6b8] sm:$0xff]
        %v740 = vld [vmem:[#allocation7 + $0x6c0] sm:$0xff]
        %v741 = vld [vmem:[#allocation7 + $0x6c8] sm:$0xff]
        %v742 = vld [vmem:[#allocation7 + $0x6d0] sm:$0xff]
        %v743 = vld [vmem:[#allocation7 + $0x6d8] sm:$0xff]
        %v744 = vld [vmem:[#allocation7 + $0x6e0] sm:$0xff]
        %v745 = vld [vmem:[#allocation7 + $0x6e8] sm:$0xff]
        %v746 = vld [vmem:[#allocation7 + $0x6f0] sm:$0xff]
        %v747 = vld [vmem:[#allocation7 + $0x6f8] sm:$0xff]
        %v748 = vld [vmem:[#allocation7 + $0x700] sm:$0xff]
        %v749 = vld [vmem:[#allocation7 + $0x708] sm:$0xff]
        %v750 = vld [vmem:[#allocation7 + $0x710] sm:$0xff]
        %v751 = vld [vmem:[#allocation7 + $0x718] sm:$0xff]
        %v752 = vld [vmem:[#allocation7 + $0x720] sm:$0xff]
        %v753 = vld [vmem:[#allocation7 + $0x728] sm:$0xff]
        %v754 = vld [vmem:[#allocation7 + $0x730] sm:$0xff]
        %v755 = vld [vmem:[#allocation7 + $0x738] sm:$0xff]
        %v756 = vld [vmem:[#allocation7 + $0x740] sm:$0xff]
        %v757 = vld [vmem:[#allocation7 + $0x748] sm:$0xff]
        %v758 = vld [vmem:[#allocation7 + $0x750] sm:$0xff]
        %v759 = vld [vmem:[#allocation7 + $0x758] sm:$0xff]
        %v760 = vld [vmem:[#allocation7 + $0x760] sm:$0xff]
        %v761 = vld [vmem:[#allocation7 + $0x768] sm:$0xff]
        %v762 = vld [vmem:[#allocation7 + $0x770] sm:$0xff]
        %v763 = vld [vmem:[#allocation7 + $0x778] sm:$0xff]
        %v764 = vld [vmem:[#allocation7 + $0x780] sm:$0xff]
        %v765 = vld [vmem:[#allocation7 + $0x788] sm:$0xff]
        %v766 = vld [vmem:[#allocation7 + $0x790] sm:$0xff]
        %v767 = vld [vmem:[#allocation7 + $0x798] sm:$0xff]
        %v768 = vld [vmem:[#allocation7 + $0x7a0] sm:$0xff]
        %v769 = vld [vmem:[#allocation7 + $0x7a8] sm:$0xff]
        %v770 = vld [vmem:[#allocation7 + $0x7b0] sm:$0xff]
        %v771 = vld [vmem:[#allocation7 + $0x7b8] sm:$0xff]
        %v772 = vld [vmem:[#allocation7 + $0x7c0] sm:$0xff]
        %v773 = vld [vmem:[#allocation7 + $0x7c8] sm:$0xff]
        %v774 = vld [vmem:[#allocation7 + $0x7d0] sm:$0xff]
        %v775 = vld [vmem:[#allocation7 + $0x7d8] sm:$0xff]
        %v776 = vld [vmem:[#allocation7 + $0x7e0] sm:$0xff]
        %v777 = vld [vmem:[#allocation7 + $0x7e8] sm:$0xff]
        %v778 = vld [vmem:[#allocation7 + $0x7f0] sm:$0xff]
        %v779 = vld [vmem:[#allocation7 + $0x7f8] sm:$0xff]
        %v780 = vld [vmem:[#allocation7 + $0x800] sm:$0xff]
        %v781 = vld [vmem:[#allocation7 + $0x808] sm:$0xff]
        %v782 = vld [vmem:[#allocation7 + $0x810] sm:$0xff]
        %v783 = vld [vmem:[#allocation7 + $0x818] sm:$0xff]
        %v784 = vld [vmem:[#allocation7 + $0x820] sm:$0xff]
        %v785 = vld [vmem:[#allocation7 + $0x828] sm:$0xff]
        %v786 = vld [vmem:[#allocation7 + $0x830] sm:$0xff]
        %v787 = vld [vmem:[#allocation7 + $0x838] sm:$0xff]
        %v788 = vld [vmem:[#allocation7 + $0x840] sm:$0xff]
        %v789 = vld [vmem:[#allocation7 + $0x848] sm:$0xff]
        %v790 = vld [vmem:[#allocation7 + $0x850] sm:$0xff]
        %v791 = vld [vmem:[#allocation7 + $0x858] sm:$0xff]
        %v792 = vld [vmem:[#allocation7 + $0x860] sm:$0xff]
        %v793 = vld [vmem:[#allocation7 + $0x868] sm:$0xff]
        %v794 = vld [vmem:[#allocation7 + $0x870] sm:$0xff]
        %v795 = vld [vmem:[#allocation7 + $0x878] sm:$0xff]
        %v796 = vld [vmem:[#allocation7 + $0x880] sm:$0xff]
        %v797 = vld [vmem:[#allocation7 + $0x888] sm:$0xff]
        %v798 = vld [vmem:[#allocation7 + $0x890] sm:$0xff]
        %v799 = vld [vmem:[#allocation7 + $0x898] sm:$0xff]
        %v800 = vld [vmem:[#allocation7 + $0x8a0] sm:$0xff]
        %v801 = vld [vmem:[#allocation7 + $0x8a8] sm:$0xff]
        %v802 = vld [vmem:[#allocation7 + $0x8b0] sm:$0xff]
        %v803 = vld [vmem:[#allocation7 + $0x8b8] sm:$0xff]
        %v804 = vld [vmem:[#allocation7 + $0x8c0] sm:$0xff]
        %v805 = vld [vmem:[#allocation7 + $0x8c8] sm:$0xff]
        %v806 = vld [vmem:[#allocation7 + $0x8d0] sm:$0xff]
        %v807 = vld [vmem:[#allocation7 + $0x8d8] sm:$0xff]
        %v808 = vld [vmem:[#allocation7 + $0x8e0] sm:$0xff]
        %v809 = vld [vmem:[#allocation7 + $0x8e8] sm:$0xff]
        %v810 = vld [vmem:[#allocation7 + $0x8f0] sm:$0xff]
        %v811 = vld [vmem:[#allocation7 + $0x8f8] sm:$0xff]
        %812 = vmatprep.subr.mxu0 %v525
        %813 = vmatpush1.msra.mxu0 %v524
        %814 = vmatprep.subr.mxu0 %v531
        %815 = vmatpush1.msra.mxu0 %v530
        %816 = vmatprep.subr.mxu0 %v537
        %817 = vmatpush1.msra.mxu0 %v536
        %818 = vmatprep.subr.mxu0 %v543
        %819 = vmatpush1.msra.mxu0 %v542
        %820 = vmatprep.subr.mxu0 %v549
        %821 = vmatpush1.msra.mxu0 %v548
        %822 = vmatprep.subr.mxu0 %v555
        %823 = vmatpush1.msra.mxu0 %v554
        %824 = vmatprep.subr.mxu0 %v561
        %825 = vmatpush1.msra.mxu0 %v560
        %826 = vmatprep.subr.mxu0 %v567
        %827 = vmatpush1.msra.mxu0 %v566
        %828 = vmatprep.subr.mxu0 %v573
        %829 = vmatpush1.msra.mxu0 %v572
        %830 = vmatprep.subr.mxu0 %v579
        %831 = vmatpush1.msra.mxu0 %v578
        %832 = vmatprep.subr.mxu0 %v585
        %833 = vmatpush1.msra.mxu0 %v584
        %834 = vmatprep.subr.mxu0 %v591
        %835 = vmatpush1.msra.mxu0 %v590
        %836 = vmatprep.subr.mxu0 %v597
        %837 = vmatpush1.msra.mxu0 %v596
        %838 = vmatprep.subr.mxu0 %v603
        %839 = vmatpush1.msra.mxu0 %v602
        %840 = vmatprep.subr.mxu0 %v609
        %841 = vmatpush1.msra.mxu0 %v608
        %842 = vmatprep.subr.mxu0 %v615
        %843 = vmatpush1.msra.mxu0 %v614
        %844 = vmatprep.subr.mxu0 %v621
        %845 = vmatpush1.msra.mxu0 %v620
        %846 = vmatprep.subr.mxu0 %v627
        %847 = vmatpush1.msra.mxu0 %v626
        %848 = vmatprep.subr.mxu0 %v633
        %849 = vmatpush1.msra.mxu0 %v632
        %850 = vmatprep.subr.mxu0 %v639
        %851 = vmatpush1.msra.mxu0 %v638
        %852 = vmatprep.subr.mxu0 %v645
        %853 = vmatpush1.msra.mxu0 %v644
        %854 = vmatprep.subr.mxu0 %v651
        %855 = vmatpush1.msra.mxu0 %v650
        %856 = vmatprep.subr.mxu0 %v657
        %857 = vmatpush1.msra.mxu0 %v656
        %858 = vmatprep.subr.mxu0 %v663
        %859 = vmatpush1.msra.mxu0 %v662
        %860 = vmatprep.subr.mxu0 %v669
        %861 = vmatpush1.msra.mxu0 %v668
        %862 = vmatprep.subr.mxu0 %v675
        %863 = vmatpush1.msra.mxu0 %v674
        %864 = vmatprep.subr.mxu0 %v681
        %865 = vmatpush1.msra.mxu0 %v680
        %866 = vmatprep.subr.mxu0 %v687
        %867 = vmatpush1.msra.mxu0 %v686
        %868 = vmatprep.subr.mxu0 %v693
        %869 = vmatpush1.msra.mxu0 %v692
        %870 = vmatprep.subr.mxu0 %v699
        %871 = vmatpush1.msra.mxu0 %v698
        %872 = vmatprep.subr.mxu0 %v705
        %873 = vmatpush1.msra.mxu0 %v704
        %874 = vmatprep.subr.mxu0 %v711
        %875 = vmatpush1.msra.mxu0 %v710
        %876 = vmatprep.mubr.f32.mxu0 %v522
        %877 = vmatmul.mubr.f32.gmra.mrb[0].mxu0 %v521
        %v878 = vpop.f32.mrb[0].mxu0
        %v879 = vadd.f32 0.0, %v878
        %v880 = vpop.f32.mrb[0].mxu0
        %v881 = vadd.f32 0.0, %v880
        %882 = vdwg.mxu0
        %883 = vmatprep.subr.mxu0 %v717
        %884 = vmatpush1.msra.mxu0 %v716
        %885 = vmatprep.subr.mxu0 %v723
        %886 = vmatpush1.msra.mxu0 %v722
        %887 = vmatprep.subr.mxu0 %v729
        %888 = vmatpush1.msra.mxu0 %v728
        %889 = vmatprep.subr.mxu0 %v735
        %890 = vmatpush1.msra.mxu0 %v734
        %891 = vmatprep.subr.mxu0 %v741
        %892 = vmatpush1.msra.mxu0 %v740
        %893 = vmatprep.subr.mxu0 %v747
        %894 = vmatpush1.msra.mxu0 %v746
        %895 = vmatprep.subr.mxu0 %v753
        %896 = vmatpush1.msra.mxu0 %v752
        %897 = vmatprep.subr.mxu0 %v759
        %898 = vmatpush1.msra.mxu0 %v758
        %899 = vmatprep.subr.mxu0 %v765
        %900 = vmatpush1.msra.mxu0 %v764
        %901 = vmatprep.subr.mxu0 %v771
        %902 = vmatpush1.msra.mxu0 %v770
        %903 = vmatprep.subr.mxu0 %v777
        %904 = vmatpush1.msra.mxu0 %v776
        %905 = vmatprep.subr.mxu0 %v783
        %906 = vmatpush1.msra.mxu0 %v782
        %907 = vmatprep.subr.mxu0 %v789
        %908 = vmatpush1.msra.mxu0 %v788
        %909 = vmatprep.subr.mxu0 %v795
        %910 = vmatpush1.msra.mxu0 %v794
        %911 = vmatprep.subr.mxu0 %v801
        %912 = vmatpush1.msra.mxu0 %v800
        %913 = vmatprep.subr.mxu0 %v807
        %914 = vmatpush1.msra.mxu0 %v806
        %915 = vmatprep.subr.mxu0 0.0
        %916 = vmatpush1.msra.mxu0 0.0
        %917 = vmatprep.subr.mxu0 0.0
        %918 = vmatpush1.msra.mxu0 0.0
        %919 = vmatprep.subr.mxu0 0.0
        %920 = vmatpush1.msra.mxu0 0.0
        %921 = vmatprep.subr.mxu0 0.0
        %922 = vmatpush1.msra.mxu0 0.0
        %923 = vmatprep.subr.mxu0 0.0
        %924 = vmatpush1.msra.mxu0 0.0
        %925 = vmatprep.subr.mxu0 0.0
        %926 = vmatpush1.msra.mxu0 0.0
        %927 = vmatprep.subr.mxu0 0.0
        %928 = vmatpush1.msra.mxu0 0.0
        %929 = vmatprep.subr.mxu0 0.0
        %930 = vmatpush1.msra.mxu0 0.0
        %931 = vmatprep.subr.mxu0 0.0
        %932 = vmatpush1.msra.mxu0 0.0
        %933 = vmatprep.subr.mxu0 0.0
        %934 = vmatpush1.msra.mxu0 0.0
        %935 = vmatprep.subr.mxu0 0.0
        %936 = vmatpush1.msra.mxu0 0.0
        %937 = vmatprep.subr.mxu0 0.0
        %938 = vmatpush1.msra.mxu0 0.0
        %939 = vmatprep.subr.mxu0 0.0
        %940 = vmatpush1.msra.mxu0 0.0
        %941 = vmatprep.subr.mxu0 0.0
        %942 = vmatpush1.msra.mxu0 0.0
        %943 = vmatprep.subr.mxu0 0.0
        %944 = vmatpush1.msra.mxu0 0.0
        %945 = vmatprep.subr.mxu0 0.0
        %946 = vmatpush1.msra.mxu0 0.0
        %947 = vmatprep.mubr.f32.mxu0 0.0
        %948 = vmatmul.mubr.f32.gmra.mrb[0].mxu0 %v523
        %v949 = vpop.f32.mrb[0].mxu0
        %v950 = vadd.f32 %v879, %v949
        %v951 = vpop.f32.mrb[0].mxu0
        %v952 = vadd.f32 %v881, %v951
        %953 = vdwg.mxu0
        %954 = vmatprep.subr.mxu0 %v527
        %955 = vmatpush1.msra.mxu0 %v526
        %956 = vmatprep.subr.mxu0 %v533
        %957 = vmatpush1.msra.mxu0 %v532
        %958 = vmatprep.subr.mxu0 %v539
        %959 = vmatpush1.msra.mxu0 %v538
        %960 = vmatprep.subr.mxu0 %v545
        %961 = vmatpush1.msra.mxu0 %v544
        %962 = vmatprep.subr.mxu0 %v551
        %963 = vmatpush1.msra.mxu0 %v550
        %964 = vmatprep.subr.mxu0 %v557
        %965 = vmatpush1.msra.mxu0 %v556
        %966 = vmatprep.subr.mxu0 %v563
        %967 = vmatpush1.msra.mxu0 %v562
        %968 = vmatprep.subr.mxu0 %v569
        %969 = vmatpush1.msra.mxu0 %v568
        %970 = vmatprep.subr.mxu0 %v575
        %971 = vmatpush1.msra.mxu0 %v574
        %972 = vmatprep.subr.mxu0 %v581
        %973 = vmatpush1.msra.mxu0 %v580
        %974 = vmatprep.subr.mxu0 %v587
        %975 = vmatpush1.msra.mxu0 %v586
        %976 = vmatprep.subr.mxu0 %v593
        %977 = vmatpush1.msra.mxu0 %v592
        %978 = vmatprep.subr.mxu0 %v599
        %979 = vmatpush1.msra.mxu0 %v598
        %980 = vmatprep.subr.mxu0 %v605
        %981 = vmatpush1.msra.mxu0 %v604
        %982 = vmatprep.subr.mxu0 %v611
        %983 = vmatpush1.msra.mxu0 %v610
        %984 = vmatprep.subr.mxu0 %v617
        %985 = vmatpush1.msra.mxu0 %v616
        %986 = vmatprep.subr.mxu0 %v623
        %987 = vmatpush1.msra.mxu0 %v622
        %988 = vmatprep.subr.mxu0 %v629
        %989 = vmatpush1.msra.mxu0 %v628
        %990 = vmatprep.subr.mxu0 %v635
        %991 = vmatpush1.msra.mxu0 %v634
        %992 = vmatprep.subr.mxu0 %v641
        %993 = vmatpush1.msra.mxu0 %v640
        %994 = vmatprep.subr.mxu0 %v647
        %995 = vmatpush1.msra.mxu0 %v646
        %996 = vmatprep.subr.mxu0 %v653
        %997 = vmatpush1.msra.mxu0 %v652
        %998 = vmatprep.subr.mxu0 %v659
        %999 = vmatpush1.msra.mxu0 %v658
        %1000 = vmatprep.subr.mxu0 %v665
        %1001 = vmatpush1.msra.mxu0 %v664
        %1002 = vmatprep.subr.mxu0 %v671
        %1003 = vmatpush1.msra.mxu0 %v670
        %1004 = vmatprep.subr.mxu0 %v677
        %1005 = vmatpush1.msra.mxu0 %v676
        %1006 = vmatprep.subr.mxu0 %v683
        %1007 = vmatpush1.msra.mxu0 %v682
        %1008 = vmatprep.subr.mxu0 %v689
        %1009 = vmatpush1.msra.mxu0 %v688
        %1010 = vmatprep.subr.mxu0 %v695
        %1011 = vmatpush1.msra.mxu0 %v694
        %1012 = vmatprep.subr.mxu0 %v701
        %1013 = vmatpush1.msra.mxu0 %v700
        %1014 = vmatprep.subr.mxu0 %v707
        %1015 = vmatpush1.msra.mxu0 %v706
        %1016 = vmatprep.subr.mxu0 %v713
        %1017 = vmatpush1.msra.mxu0 %v712
        %1018 = vmatprep.mubr.f32.mxu0 %v522
        %1019 = vmatmul.mubr.f32.gmra.mrb[0].mxu0 %v521
        %v1020 = vpop.f32.mrb[0].mxu0
        %v1021 = vadd.f32 0.0, %v1020
        %v1022 = vpop.f32.mrb[0].mxu0
        %v1023 = vadd.f32 0.0, %v1022
        %1024 = vdwg.mxu0
        %1025 = vmatprep.subr.mxu0 %v719
        %1026 = vmatpush1.msra.mxu0 %v718
        %1027 = vmatprep.subr.mxu0 %v725
        %1028 = vmatpush1.msra.mxu0 %v724
        %1029 = vmatprep.subr.mxu0 %v731
        %1030 = vmatpush1.msra.mxu0 %v730
        %1031 = vmatprep.subr.mxu0 %v737
        %1032 = vmatpush1.msra.mxu0 %v736
        %1033 = vmatprep.subr.mxu0 %v743
        %1034 = vmatpush1.msra.mxu0 %v742
        %1035 = vmatprep.subr.mxu0 %v749
        %1036 = vmatpush1.msra.mxu0 %v748
        %1037 = vmatprep.subr.mxu0 %v755
        %1038 = vmatpush1.msra.mxu0 %v754
        %1039 = vmatprep.subr.mxu0 %v761
        %1040 = vmatpush1.msra.mxu0 %v760
        %1041 = vmatprep.subr.mxu0 %v767
        %1042 = vmatpush1.msra.mxu0 %v766
        %1043 = vmatprep.subr.mxu0 %v773
        %1044 = vmatpush1.msra.mxu0 %v772
        %1045 = vmatprep.subr.mxu0 %v779
        %1046 = vmatpush1.msra.mxu0 %v778
        %1047 = vmatprep.subr.mxu0 %v785
        %1048 = vmatpush1.msra.mxu0 %v784
        %1049 = vmatprep.subr.mxu0 %v791
        %1050 = vmatpush1.msra.mxu0 %v790
        %1051 = vmatprep.subr.mxu0 %v797
        %1052 = vmatpush1.msra.mxu0 %v796
        %1053 = vmatprep.subr.mxu0 %v803
        %1054 = vmatpush1.msra.mxu0 %v802
        %1055 = vmatprep.subr.mxu0 %v809
        %1056 = vmatpush1.msra.mxu0 %v808
        %1057 = vmatprep.subr.mxu0 0.0
        %1058 = vmatpush1.msra.mxu0 0.0
        %1059 = vmatprep.subr.mxu0 0.0
        %1060 = vmatpush1.msra.mxu0 0.0
        %1061 = vmatprep.subr.mxu0 0.0
        %1062 = vmatpush1.msra.mxu0 0.0
        %1063 = vmatprep.subr.mxu0 0.0
        %1064 = vmatpush1.msra.mxu0 0.0
        %1065 = vmatprep.subr.mxu0 0.0
        %1066 = vmatpush1.msra.mxu0 0.0
        %1067 = vmatprep.subr.mxu0 0.0
        %1068 = vmatpush1.msra.mxu0 0.0
        %1069 = vmatprep.subr.mxu0 0.0
        %1070 = vmatpush1.msra.mxu0 0.0
        %1071 = vmatprep.subr.mxu0 0.0
        %1072 = vmatpush1.msra.mxu0 0.0
        %1073 = vmatprep.subr.mxu0 0.0
        %1074 = vmatpush1.msra.mxu0 0.0
        %1075 = vmatprep.subr.mxu0 0.0
        %1076 = vmatpush1.msra.mxu0 0.0
        %1077 = vmatprep.subr.mxu0 0.0
        %1078 = vmatpush1.msra.mxu0 0.0
        %1079 = vmatprep.subr.mxu0 0.0
        %1080 = vmatpush1.msra.mxu0 0.0
        %1081 = vmatprep.subr.mxu0 0.0
        %1082 = vmatpush1.msra.mxu0 0.0
        %1083 = vmatprep.subr.mxu0 0.0
        %1084 = vmatpush1.msra.mxu0 0.0
        %1085 = vmatprep.subr.mxu0 0.0
        %1086 = vmatpush1.msra.mxu0 0.0
        %1087 = vmatprep.subr.mxu0 0.0
        %1088 = vmatpush1.msra.mxu0 0.0
        %1089 = vmatprep.mubr.f32.mxu0 0.0
        %1090 = vmatmul.mubr.f32.gmra.mrb[0].mxu0 %v523
        %v1091 = vpop.f32.mrb[0].mxu0
        %v1092 = vadd.f32 %v1021, %v1091
        %v1093 = vpop.f32.mrb[0].mxu0
        %v1094 = vadd.f32 %v1023, %v1093
        %1095 = vdwg.mxu0
        %1096 = vmatprep.subr.mxu0 %v529
        %1097 = vmatpush1.msra.mxu0 %v528
        %1098 = vmatprep.subr.mxu0 %v535
        %1099 = vmatpush1.msra.mxu0 %v534
        %1100 = vmatprep.subr.mxu0 %v541
        %1101 = vmatpush1.msra.mxu0 %v540
        %1102 = vmatprep.subr.mxu0 %v547
        %1103 = vmatpush1.msra.mxu0 %v546
        %1104 = vmatprep.subr.mxu0 %v553
        %1105 = vmatpush1.msra.mxu0 %v552
        %1106 = vmatprep.subr.mxu0 %v559
        %1107 = vmatpush1.msra.mxu0 %v558
        %1108 = vmatprep.subr.mxu0 %v565
        %1109 = vmatpush1.msra.mxu0 %v564
        %1110 = vmatprep.subr.mxu0 %v571
        %1111 = vmatpush1.msra.mxu0 %v570
        %1112 = vmatprep.subr.mxu0 %v577
        %1113 = vmatpush1.msra.mxu0 %v576
        %1114 = vmatprep.subr.mxu0 %v583
        %1115 = vmatpush1.msra.mxu0 %v582
        %1116 = vmatprep.subr.mxu0 %v589
        %1117 = vmatpush1.msra.mxu0 %v588
        %1118 = vmatprep.subr.mxu0 %v595
        %1119 = vmatpush1.msra.mxu0 %v594
        %1120 = vmatprep.subr.mxu0 %v601
        %1121 = vmatpush1.msra.mxu0 %v600
        %1122 = vmatprep.subr.mxu0 %v607
        %1123 = vmatpush1.msra.mxu0 %v606
        %1124 = vmatprep.subr.mxu0 %v613
        %1125 = vmatpush1.msra.mxu0 %v612
        %1126 = vmatprep.subr.mxu0 %v619
        %1127 = vmatpush1.msra.mxu0 %v618
        %1128 = vmatprep.subr.mxu0 %v625
        %1129 = vmatpush1.msra.mxu0 %v624
        %1130 = vmatprep.subr.mxu0 %v631
        %1131 = vmatpush1.msra.mxu0 %v630
        %1132 = vmatprep.subr.mxu0 %v637
        %1133 = vmatpush1.msra.mxu0 %v636
        %1134 = vmatprep.subr.mxu0 %v643
        %1135 = vmatpush1.msra.mxu0 %v642
        %1136 = vmatprep.subr.mxu0 %v649
        %1137 = vmatpush1.msra.mxu0 %v648
        %1138 = vmatprep.subr.mxu0 %v655
        %1139 = vmatpush1.msra.mxu0 %v654
        %1140 = vmatprep.subr.mxu0 %v661
        %1141 = vmatpush1.msra.mxu0 %v660
        %1142 = vmatprep.subr.mxu0 %v667
        %1143 = vmatpush1.msra.mxu0 %v666
        %1144 = vmatprep.subr.mxu0 %v673
        %1145 = vmatpush1.msra.mxu0 %v672
        %1146 = vmatprep.subr.mxu0 %v679
        %1147 = vmatpush1.msra.mxu0 %v678
        %1148 = vmatprep.subr.mxu0 %v685
        %1149 = vmatpush1.msra.mxu0 %v684
        %1150 = vmatprep.subr.mxu0 %v691
        %1151 = vmatpush1.msra.mxu0 %v690
        %1152 = vmatprep.subr.mxu0 %v697
        %1153 = vmatpush1.msra.mxu0 %v696
        %1154 = vmatprep.subr.mxu0 %v703
        %1155 = vmatpush1.msra.mxu0 %v702
        %1156 = vmatprep.subr.mxu0 %v709
        %1157 = vmatpush1.msra.mxu0 %v708
        %1158 = vmatprep.subr.mxu0 %v715
        %1159 = vmatpush1.msra.mxu0 %v714
        %1160 = vmatprep.mubr.f32.mxu0 %v522
        %1161 = vmatmul.mubr.f32.gmra.mrb[0].mxu0 %v521
        %v1162 = vpop.f32.mrb[0].mxu0
        %v1163 = vadd.f32 0.0, %v1162
        %v1164 = vpop.f32.mrb[0].mxu0
        %v1165 = vadd.f32 0.0, %v1164
        %1166 = vdwg.mxu0
        %1167 = vmatprep.subr.mxu0 %v721
        %1168 = vmatpush1.msra.mxu0 %v720
        %1169 = vmatprep.subr.mxu0 %v727
        %1170 = vmatpush1.msra.mxu0 %v726
        %1171 = vmatprep.subr.mxu0 %v733
        %1172 = vmatpush1.msra.mxu0 %v732
        %1173 = vmatprep.subr.mxu0 %v739
        %1174 = vmatpush1.msra.mxu0 %v738
        %1175 = vmatprep.subr.mxu0 %v745
        %1176 = vmatpush1.msra.mxu0 %v744
        %1177 = vmatprep.subr.mxu0 %v751
        %1178 = vmatpush1.msra.mxu0 %v750
        %1179 = vmatprep.subr.mxu0 %v757
        %1180 = vmatpush1.msra.mxu0 %v756
        %1181 = vmatprep.subr.mxu0 %v763
        %1182 = vmatpush1.msra.mxu0 %v762
        %1183 = vmatprep.subr.mxu0 %v769
        %1184 = vmatpush1.msra.mxu0 %v768
        %1185 = vmatprep.subr.mxu0 %v775
        %1186 = vmatpush1.msra.mxu0 %v774
        %1187 = vmatprep.subr.mxu0 %v781
        %1188 = vmatpush1.msra.mxu0 %v780
        %1189 = vmatprep.subr.mxu0 %v787
        %1190 = vmatpush1.msra.mxu0 %v786
        %1191 = vmatprep.subr.mxu0 %v793
        %1192 = vmatpush1.msra.mxu0 %v792
        %1193 = vmatprep.subr.mxu0 %v799
        %1194 = vmatpush1.msra.mxu0 %v798
        %1195 = vmatprep.subr.mxu0 %v805
        %1196 = vmatpush1.msra.mxu0 %v804
        %1197 = vmatprep.subr.mxu0 %v811
        %1198 = vmatpush1.msra.mxu0 %v810
        %1199 = vmatprep.subr.mxu0 0.0
        %1200 = vmatpush1.msra.mxu0 0.0
        %1201 = vmatprep.subr.mxu0 0.0
        %1202 = vmatpush1.msra.mxu0 0.0
        %1203 = vmatprep.subr.mxu0 0.0
        %1204 = vmatpush1.msra.mxu0 0.0
        %1205 = vmatprep.subr.mxu0 0.0
        %1206 = vmatpush1.msra.mxu0 0.0
        %1207 = vmatprep.subr.mxu0 0.0
        %1208 = vmatpush1.msra.mxu0 0.0
        %1209 = vmatprep.subr.mxu0 0.0
        %1210 = vmatpush1.msra.mxu0 0.0
        %1211 = vmatprep.subr.mxu0 0.0
        %1212 = vmatpush1.msra.mxu0 0.0
        %1213 = vmatprep.subr.mxu0 0.0
        %1214 = vmatpush1.msra.mxu0 0.0
        %1215 = vmatprep.subr.mxu0 0.0
        %1216 = vmatpush1.msra.mxu0 0.0
        %1217 = vmatprep.subr.mxu0 0.0
        %1218 = vmatpush1.msra.mxu0 0.0
        %1219 = vmatprep.subr.mxu0 0.0
        %1220 = vmatpush1.msra.mxu0 0.0
        %1221 = vmatprep.subr.mxu0 0.0
        %1222 = vmatpush1.msra.mxu0 0.0
        %1223 = vmatprep.subr.mxu0 0.0
        %1224 = vmatpush1.msra.mxu0 0.0
        %1225 = vmatprep.subr.mxu0 0.0
        %1226 = vmatpush1.msra.mxu0 0.0
        %1227 = vmatprep.subr.mxu0 0.0
        %1228 = vmatpush1.msra.mxu0 0.0
        %1229 = vmatprep.subr.mxu0 0.0
        %1230 = vmatpush1.msra.mxu0 0.0
        %1231 = vmatprep.mubr.f32.mxu0 0.0
        %1232 = vmatmul.mubr.f32.gmra.mrb[0].mxu0 %v523
        %v1233 = vpop.f32.mrb[0].mxu0
        %v1234 = vadd.f32 %v1163, %v1233
        %v1235 = vpop.f32.mrb[0].mxu0
        %v1236 = vadd.f32 %v1165, %v1235
        %1237 = vdwg.mxu0
        %v1238 = vld [vmem:[#allocation8] sm:$0xff]
        %v1239 = vld [vmem:[#allocation8 + $0x8] sm:$0xff]
        %v1240 = vld [vmem:[#allocation8 + $0x10] sm:$0xff]
        %v1241 = vld [vmem:[#allocation8 + $0x18] sm:$0xff]
        %v1242 = vld [vmem:[#allocation8 + $0x20] sm:$0xff]
        %v1243 = vld [vmem:[#allocation8 + $0x28] sm:$0xff]
        %v1244 = vld [vmem:[#allocation8 + $0x30] sm:$0xff]
        %v1245 = vld [vmem:[#allocation8 + $0x38] sm:$0xff]
        %v1246 = vld [vmem:[#allocation8 + $0x40] sm:$0xff]
        %v1247 = vld [vmem:[#allocation8 + $0x48] sm:$0xff]
        %v1248 = vld [vmem:[#allocation8 + $0x50] sm:$0xff]
        %v1249 = vld [vmem:[#allocation8 + $0x58] sm:$0xff]
        %v1250 = vld [vmem:[#allocation8 + $0x60] sm:$0xff]
        %v1251 = vld [vmem:[#allocation8 + $0x68] sm:$0xff]
        %v1252 = vld [vmem:[#allocation8 + $0x70] sm:$0xff]
        %v1253 = vld [vmem:[#allocation8 + $0x78] sm:$0xff]
        %v1254 = vld [vmem:[#allocation8 + $0x80] sm:$0xff]
        %v1255 = vld [vmem:[#allocation8 + $0x88] sm:$0xff]
        %v1256 = vld [vmem:[#allocation8 + $0x90] sm:$0xff]
        %v1257 = vld [vmem:[#allocation8 + $0x98] sm:$0xff]
        %v1258 = vld [vmem:[#allocation8 + $0xa0] sm:$0xff]
        %v1259 = vld [vmem:[#allocation8 + $0xa8] sm:$0xff]
        %v1260 = vld [vmem:[#allocation8 + $0xb0] sm:$0xff]
        %v1261 = vld [vmem:[#allocation8 + $0xb8] sm:$0xff]
        %v1262 = vld [vmem:[#allocation8 + $0xc0] sm:$0xff]
        %v1263 = vld [vmem:[#allocation8 + $0xc8] sm:$0xff]
        %v1264 = vld [vmem:[#allocation8 + $0xd0] sm:$0xff]
        %v1265 = vld [vmem:[#allocation8 + $0xd8] sm:$0xff]
        %v1266 = vld [vmem:[#allocation8 + $0xe0] sm:$0xff]
        %v1267 = vld [vmem:[#allocation8 + $0xe8] sm:$0xff]
        %v1268 = vld [vmem:[#allocation8 + $0xf0] sm:$0xff]
        %v1269 = vld [vmem:[#allocation8 + $0xf8] sm:$0xff]
        %v1270 = vld [vmem:[#allocation8 + $0x100] sm:$0xff]
        %v1271 = vld [vmem:[#allocation8 + $0x108] sm:$0xff]
        %v1272 = vld [vmem:[#allocation8 + $0x110] sm:$0xff]
        %v1273 = vld [vmem:[#allocation8 + $0x118] sm:$0xff]
        %v1274 = vld [vmem:[#allocation8 + $0x120] sm:$0xff]
        %v1275 = vld [vmem:[#allocation8 + $0x128] sm:$0xff]
        %v1276 = vld [vmem:[#allocation8 + $0x130] sm:$0xff]
        %v1277 = vld [vmem:[#allocation8 + $0x138] sm:$0xff]
        %v1278 = vld [vmem:[#allocation8 + $0x140] sm:$0xff]
        %v1279 = vld [vmem:[#allocation8 + $0x148] sm:$0xff]
        %v1280 = vld [vmem:[#allocation8 + $0x150] sm:$0xff]
        %v1281 = vld [vmem:[#allocation8 + $0x158] sm:$0xff]
        %v1282 = vld [vmem:[#allocation8 + $0x160] sm:$0xff]
        %v1283 = vld [vmem:[#allocation8 + $0x168] sm:$0xff]
        %v1284 = vld [vmem:[#allocation8 + $0x170] sm:$0xff]
        %v1285 = vld [vmem:[#allocation8 + $0x178] sm:$0xff]
        %v1286 = vmul.f32 %v1094, %v1094
        %v1287 = vmul.f32 %v1234, %v1234
        %v1288 = vmul.f32 %v1236, %v1236
        %v1289 = vmul.f32 %v950, %v1094
        %v1290 = vmul.f32 %v952, %v1234
        %v1291 = vmul.f32 %v1092, %v1236
        %1292 = vmatprep.subr.mxu0 0.0
        %1293 = vmatpush1.msra.mxu0 %v1238
        %1294 = vmatprep.subr.mxu0 0.0
        %1295 = vmatpush1.msra.mxu0 %v1239
        %1296 = vmatprep.subr.mxu0 0.0
        %1297 = vmatpush1.msra.mxu0 %v1240
        %1298 = vmatprep.subr.mxu0 0.0
        %1299 = vmatpush1.msra.mxu0 %v1241
        %1300 = vmatprep.subr.mxu0 0.0
        %1301 = vmatpush1.msra.mxu0 %v1242
        %1302 = vmatprep.subr.mxu0 0.0
        %1303 = vmatpush1.msra.mxu0 %v1243
        %1304 = vmatprep.subr.mxu0 0.0
        %1305 = vmatpush1.msra.mxu0 %v1244
        %1306 = vmatprep.subr.mxu0 0.0
        %1307 = vmatpush1.msra.mxu0 %v1245
        %1308 = vmatprep.subr.mxu0 0.0
        %1309 = vmatpush1.msra.mxu0 %v1246
        %1310 = vmatprep.subr.mxu0 0.0
        %1311 = vmatpush1.msra.mxu0 %v1247
        %1312 = vmatprep.subr.mxu0 0.0
        %1313 = vmatpush1.msra.mxu0 %v1248
        %1314 = vmatprep.subr.mxu0 0.0
        %1315 = vmatpush1.msra.mxu0 %v1249
        %1316 = vmatprep.subr.mxu0 0.0
        %1317 = vmatpush1.msra.mxu0 %v1250
        %1318 = vmatprep.subr.mxu0 0.0
        %1319 = vmatpush1.msra.mxu0 %v1251
        %1320 = vmatprep.subr.mxu0 0.0
        %1321 = vmatpush1.msra.mxu0 %v1252
        %1322 = vmatprep.subr.mxu0 0.0
        %1323 = vmatpush1.msra.mxu0 %v1253
        %1324 = vmatprep.subr.mxu0 0.0
        %1325 = vmatpush1.msra.mxu0 %v1254
        %1326 = vmatprep.subr.mxu0 0.0
        %1327 = vmatpush1.msra.mxu0 %v1255
        %1328 = vmatprep.subr.mxu0 0.0
        %1329 = vmatpush1.msra.mxu0 %v1256
        %1330 = vmatprep.subr.mxu0 0.0
        %1331 = vmatpush1.msra.mxu0 %v1257
        %1332 = vmatprep.subr.mxu0 0.0
        %1333 = vmatpush1.msra.mxu0 %v1258
        %1334 = vmatprep.subr.mxu0 0.0
        %1335 = vmatpush1.msra.mxu0 %v1259
        %1336 = vmatprep.subr.mxu0 0.0
        %1337 = vmatpush1.msra.mxu0 %v1260
        %1338 = vmatprep.subr.mxu0 0.0
        %1339 = vmatpush1.msra.mxu0 %v1261
        %1340 = vmatprep.subr.mxu0 0.0
        %1341 = vmatpush1.msra.mxu0 %v1262
        %1342 = vmatprep.subr.mxu0 0.0
        %1343 = vmatpush1.msra.mxu0 %v1263
        %1344 = vmatprep.subr.mxu0 0.0
        %1345 = vmatpush1.msra.mxu0 %v1264
        %1346 = vmatprep.subr.mxu0 0.0
        %1347 = vmatpush1.msra.mxu0 %v1265
        %1348 = vmatprep.subr.mxu0 0.0
        %1349 = vmatpush1.msra.mxu0 %v1266
        %1350 = vmatprep.subr.mxu0 0.0
        %1351 = vmatpush1.msra.mxu0 %v1267
        %1352 = vmatprep.subr.mxu0 0.0
        %1353 = vmatpush1.msra.mxu0 %v1268
        %1354 = vmatprep.subr.mxu0 0.0
        %1355 = vmatpush1.msra.mxu0 %v1269
        %1356 = vmatprep.mubr.f32.mxu0 %v1287
        %1357 = vmatmul.mubr.f32.gmra.mrb[0].mxu0 %v1286
        %v1358 = vpop.f32.mrb[0].mxu0
        %v1359 = vadd.f32 0.0, %v1358
        %v1360 = vpop.f32.mrb[0].mxu0
        %1361 = vdwg.mxu0
        %1362 = vmatprep.subr.mxu0 0.0
        %1363 = vmatpush1.msra.mxu0 %v1270
        %1364 = vmatprep.subr.mxu0 0.0
        %1365 = vmatpush1.msra.mxu0 %v1271
        %1366 = vmatprep.subr.mxu0 0.0
        %1367 = vmatpush1.msra.mxu0 %v1272
        %1368 = vmatprep.subr.mxu0 0.0
        %1369 = vmatpush1.msra.mxu0 %v1273
        %1370 = vmatprep.subr.mxu0 0.0
        %1371 = vmatpush1.msra.mxu0 %v1274
        %1372 = vmatprep.subr.mxu0 0.0
        %1373 = vmatpush1.msra.mxu0 %v1275
        %1374 = vmatprep.subr.mxu0 0.0
        %1375 = vmatpush1.msra.mxu0 %v1276
        %1376 = vmatprep.subr.mxu0 0.0
        %1377 = vmatpush1.msra.mxu0 %v1277
        %1378 = vmatprep.subr.mxu0 0.0
        %1379 = vmatpush1.msra.mxu0 %v1278
        %1380 = vmatprep.subr.mxu0 0.0
        %1381 = vmatpush1.msra.mxu0 %v1279
        %1382 = vmatprep.subr.mxu0 0.0
        %1383 = vmatpush1.msra.mxu0 %v1280
        %1384 = vmatprep.subr.mxu0 0.0
        %1385 = vmatpush1.msra.mxu0 %v1281
        %1386 = vmatprep.subr.mxu0 0.0
        %1387 = vmatpush1.msra.mxu0 %v1282
        %1388 = vmatprep.subr.mxu0 0.0
        %1389 = vmatpush1.msra.mxu0 %v1283
        %1390 = vmatprep.subr.mxu0 0.0
        %1391 = vmatpush1.msra.mxu0 %v1284
        %1392 = vmatprep.subr.mxu0 0.0
        %1393 = vmatpush1.msra.mxu0 %v1285
        %1394 = vmatprep.subr.mxu0 0.0
        %1395 = vmatpush1.msra.mxu0 0.0
        %1396 = vmatprep.subr.mxu0 0.0
        %1397 = vmatpush1.msra.mxu0 0.0
        %1398 = vmatprep.subr.mxu0 0.0
        %1399 = vmatpush1.msra.mxu0 0.0
        %1400 = vmatprep.subr.mxu0 0.0
        %1401 = vmatpush1.msra.mxu0 0.0
        %1402 = vmatprep.subr.mxu0 0.0
        %1403 = vmatpush1.msra.mxu0 0.0
        %1404 = vmatprep.subr.mxu0 0.0
        %1405 = vmatpush1.msra.mxu0 0.0
        %1406 = vmatprep.subr.mxu0 0.0
        %1407 = vmatpush1.msra.mxu0 0.0
        %1408 = vmatprep.subr.mxu0 0.0
        %1409 = vmatpush1.msra.mxu0 0.0
        %1410 = vmatprep.subr.mxu0 0.0
        %1411 = vmatpush1.msra.mxu0 0.0
        %1412 = vmatprep.subr.mxu0 0.0
        %1413 = vmatpush1.msra.mxu0 0.0
        %1414 = vmatprep.subr.mxu0 0.0
        %1415 = vmatpush1.msra.mxu0 0.0
        %1416 = vmatprep.subr.mxu0 0.0
        %1417 = vmatpush1.msra.mxu0 0.0
        %1418 = vmatprep.subr.mxu0 0.0
        %1419 = vmatpush1.msra.mxu0 0.0
        %1420 = vmatprep.subr.mxu0 0.0
        %1421 = vmatpush1.msra.mxu0 0.0
        %1422 = vmatprep.subr.mxu0 0.0
        %1423 = vmatpush1.msra.mxu0 0.0
        %1424 = vmatprep.subr.mxu0 0.0
        %1425 = vmatpush1.msra.mxu0 0.0
        %1426 = vmatprep.mubr.f32.mxu0 0.0
        %1427 = vmatmul.mubr.f32.gmra.mrb[0].mxu0 %v1288
        %v1428 = vpop.f32.mrb[0].mxu0
        %v1429 = vadd.f32 %v1359, %v1428
        %v1430 = vpop.f32.mrb[0].mxu0
        %1431 = vdwg.mxu0
        %v1432 = vrsqrt.pop %v1429
        %v1433 = vmul.f32 %v1429, %v1432
        %vm1434 = vcmp.eq.f32.partialorder %v1429, inf
        %v1435 = vsel %vm1434, %v1429, %v1433
        %vm1436 = vcmp.eq.f32.partialorder %v1429, 0.0
        %v1437 = vand.u32 %v1429, 2147483648
        %v1438 = vsel %vm1436, %v1437, %v1435
        %1439 = vmatprep.subr.mxu0 0.0
        %1440 = vmatpush1.msra.mxu0 %v1238
        %1441 = vmatprep.subr.mxu0 0.0
        %1442 = vmatpush1.msra.mxu0 %v1239
        %1443 = vmatprep.subr.mxu0 0.0
        %1444 = vmatpush1.msra.mxu0 %v1240
        %1445 = vmatprep.subr.mxu0 0.0
        %1446 = vmatpush1.msra.mxu0 %v1241
        %1447 = vmatprep.subr.mxu0 0.0
        %1448 = vmatpush1.msra.mxu0 %v1242
        %1449 = vmatprep.subr.mxu0 0.0
        %1450 = vmatpush1.msra.mxu0 %v1243
        %1451 = vmatprep.subr.mxu0 0.0
        %1452 = vmatpush1.msra.mxu0 %v1244
        %1453 = vmatprep.subr.mxu0 0.0
        %1454 = vmatpush1.msra.mxu0 %v1245
        %1455 = vmatprep.subr.mxu0 0.0
        %1456 = vmatpush1.msra.mxu0 %v1246
        %1457 = vmatprep.subr.mxu0 0.0
        %1458 = vmatpush1.msra.mxu0 %v1247
        %1459 = vmatprep.subr.mxu0 0.0
        %1460 = vmatpush1.msra.mxu0 %v1248
        %1461 = vmatprep.subr.mxu0 0.0
        %1462 = vmatpush1.msra.mxu0 %v1249
        %1463 = vmatprep.subr.mxu0 0.0
        %1464 = vmatpush1.msra.mxu0 %v1250
        %1465 = vmatprep.subr.mxu0 0.0
        %1466 = vmatpush1.msra.mxu0 %v1251
        %1467 = vmatprep.subr.mxu0 0.0
        %1468 = vmatpush1.msra.mxu0 %v1252
        %1469 = vmatprep.subr.mxu0 0.0
        %1470 = vmatpush1.msra.mxu0 %v1253
        %1471 = vmatprep.subr.mxu0 0.0
        %1472 = vmatpush1.msra.mxu0 %v1254
        %1473 = vmatprep.subr.mxu0 0.0
        %1474 = vmatpush1.msra.mxu0 %v1255
        %1475 = vmatprep.subr.mxu0 0.0
        %1476 = vmatpush1.msra.mxu0 %v1256
        %1477 = vmatprep.subr.mxu0 0.0
        %1478 = vmatpush1.msra.mxu0 %v1257
        %1479 = vmatprep.subr.mxu0 0.0
        %1480 = vmatpush1.msra.mxu0 %v1258
        %1481 = vmatprep.subr.mxu0 0.0
        %1482 = vmatpush1.msra.mxu0 %v1259
        %1483 = vmatprep.subr.mxu0 0.0
        %1484 = vmatpush1.msra.mxu0 %v1260
        %1485 = vmatprep.subr.mxu0 0.0
        %1486 = vmatpush1.msra.mxu0 %v1261
        %1487 = vmatprep.subr.mxu0 0.0
        %1488 = vmatpush1.msra.mxu0 %v1262
        %1489 = vmatprep.subr.mxu0 0.0
        %1490 = vmatpush1.msra.mxu0 %v1263
        %1491 = vmatprep.subr.mxu0 0.0
        %1492 = vmatpush1.msra.mxu0 %v1264
        %1493 = vmatprep.subr.mxu0 0.0
        %1494 = vmatpush1.msra.mxu0 %v1265
        %1495 = vmatprep.subr.mxu0 0.0
        %1496 = vmatpush1.msra.mxu0 %v1266
        %1497 = vmatprep.subr.mxu0 0.0
        %1498 = vmatpush1.msra.mxu0 %v1267
        %1499 = vmatprep.subr.mxu0 0.0
        %1500 = vmatpush1.msra.mxu0 %v1268
        %1501 = vmatprep.subr.mxu0 0.0
        %1502 = vmatpush1.msra.mxu0 %v1269
        %1503 = vmatprep.mubr.f32.mxu0 %v1290
        %1504 = vmatmul.mubr.f32.gmra.mrb[0].mxu0 %v1289
        %v1505 = vpop.f32.mrb[0].mxu0
        %v1506 = vadd.f32 0.0, %v1505
        %v1507 = vpop.f32.mrb[0].mxu0
        %1508 = vdwg.mxu0
        %1509 = vmatprep.subr.mxu0 0.0
        %1510 = vmatpush1.msra.mxu0 %v1270
        %1511 = vmatprep.subr.mxu0 0.0
        %1512 = vmatpush1.msra.mxu0 %v1271
        %1513 = vmatprep.subr.mxu0 0.0
        %1514 = vmatpush1.msra.mxu0 %v1272
        %1515 = vmatprep.subr.mxu0 0.0
        %1516 = vmatpush1.msra.mxu0 %v1273
        %1517 = vmatprep.subr.mxu0 0.0
        %1518 = vmatpush1.msra.mxu0 %v1274
        %1519 = vmatprep.subr.mxu0 0.0
        %1520 = vmatpush1.msra.mxu0 %v1275
        %1521 = vmatprep.subr.mxu0 0.0
        %1522 = vmatpush1.msra.mxu0 %v1276
        %1523 = vmatprep.subr.mxu0 0.0
        %1524 = vmatpush1.msra.mxu0 %v1277
        %1525 = vmatprep.subr.mxu0 0.0
        %1526 = vmatpush1.msra.mxu0 %v1278
        %1527 = vmatprep.subr.mxu0 0.0
        %1528 = vmatpush1.msra.mxu0 %v1279
        %1529 = vmatprep.subr.mxu0 0.0
        %1530 = vmatpush1.msra.mxu0 %v1280
        %1531 = vmatprep.subr.mxu0 0.0
        %1532 = vmatpush1.msra.mxu0 %v1281
        %1533 = vmatprep.subr.mxu0 0.0
        %1534 = vmatpush1.msra.mxu0 %v1282
        %1535 = vmatprep.subr.mxu0 0.0
        %1536 = vmatpush1.msra.mxu0 %v1283
        %1537 = vmatprep.subr.mxu0 0.0
        %1538 = vmatpush1.msra.mxu0 %v1284
        %1539 = vmatprep.subr.mxu0 0.0
        %1540 = vmatpush1.msra.mxu0 %v1285
        %1541 = vmatprep.subr.mxu0 0.0
        %1542 = vmatpush1.msra.mxu0 0.0
        %1543 = vmatprep.subr.mxu0 0.0
        %1544 = vmatpush1.msra.mxu0 0.0
        %1545 = vmatprep.subr.mxu0 0.0
        %1546 = vmatpush1.msra.mxu0 0.0
        %1547 = vmatprep.subr.mxu0 0.0
        %1548 = vmatpush1.msra.mxu0 0.0
        %1549 = vmatprep.subr.mxu0 0.0
        %1550 = vmatpush1.msra.mxu0 0.0
        %1551 = vmatprep.subr.mxu0 0.0
        %1552 = vmatpush1.msra.mxu0 0.0
        %1553 = vmatprep.subr.mxu0 0.0
        %1554 = vmatpush1.msra.mxu0 0.0
        %1555 = vmatprep.subr.mxu0 0.0
        %1556 = vmatpush1.msra.mxu0 0.0
        %1557 = vmatprep.subr.mxu0 0.0
        %1558 = vmatpush1.msra.mxu0 0.0
        %1559 = vmatprep.subr.mxu0 0.0
        %1560 = vmatpush1.msra.mxu0 0.0
        %1561 = vmatprep.subr.mxu0 0.0
        %1562 = vmatpush1.msra.mxu0 0.0
        %1563 = vmatprep.subr.mxu0 0.0
        %1564 = vmatpush1.msra.mxu0 0.0
        %1565 = vmatprep.subr.mxu0 0.0
        %1566 = vmatpush1.msra.mxu0 0.0
        %1567 = vmatprep.subr.mxu0 0.0
        %1568 = vmatpush1.msra.mxu0 0.0
        %1569 = vmatprep.subr.mxu0 0.0
        %1570 = vmatpush1.msra.mxu0 0.0
        %1571 = vmatprep.subr.mxu0 0.0
        %1572 = vmatpush1.msra.mxu0 0.0
        %1573 = vmatprep.mubr.f32.mxu0 0.0
        %1574 = vmatmul.mubr.f32.gmra.mrb[0].mxu0 %v1291
        %v1575 = vpop.f32.mrb[0].mxu0
        %v1576 = vadd.f32 %v1506, %v1575
        %v1577 = vpop.f32.mrb[0].mxu0
        %1578 = vdwg.mxu0
        %v1579 = vld [vmem:[#allocation10] sm:$0xff]
        %v1580 = vld [vmem:[#allocation10 + $0x8] sm:$0xff]
        %v1581 = vld [vmem:[#allocation10 + $0x10] sm:$0xff]
        %v1582 = vld [vmem:[#allocation10 + $0x18] sm:$0xff]
        %v1583 = vld [vmem:[#allocation10 + $0x20] sm:$0xff]
        %v1584 = vld [vmem:[#allocation10 + $0x28] sm:$0xff]
        %v1585 = vld [vmem:[#allocation10 + $0x30] sm:$0xff]
        %v1586 = vld [vmem:[#allocation10 + $0x38] sm:$0xff]
        %v1587 = vld [vmem:[#allocation10 + $0x40] sm:$0xff]
        %v1588 = vld [vmem:[#allocation10 + $0x48] sm:$0xff]
        %v1589 = vld [vmem:[#allocation10 + $0x50] sm:$0xff]
        %v1590 = vld [vmem:[#allocation10 + $0x58] sm:$0xff]
        %v1591 = vld [vmem:[#allocation10 + $0x60] sm:$0xff]
        %v1592 = vld [vmem:[#allocation10 + $0x68] sm:$0xff]
        %v1593 = vld [vmem:[#allocation10 + $0x70] sm:$0xff]
        %v1594 = vld [vmem:[#allocation10 + $0x78] sm:$0xff]
        %v1595 = vld [vmem:[%s446] sm:$0xff]
        %v1596 = vld [vmem:[#allocation11] sm:$0xff]
        %v1597 = vld [vmem:[#allocation11 + $0x8] sm:$0xff]
        %v1598 = vld [vmem:[#allocation11 + $0x10] sm:$0xff]
        %v1599 = vld [vmem:[#allocation11 + $0x18] sm:$0xff]
        %v1600 = vld [vmem:[#allocation11 + $0x20] sm:$0xff]
        %v1601 = vld [vmem:[#allocation11 + $0x28] sm:$0xff]
        %v1602 = vld [vmem:[#allocation11 + $0x30] sm:$0xff]
        %v1603 = vld [vmem:[#allocation11 + $0x38] sm:$0xff]
        %v1604 = vld [vmem:[#allocation11 + $0x40] sm:$0xff]
        %v1605 = vld [vmem:[#allocation11 + $0x48] sm:$0xff]
        %v1606 = vld [vmem:[#allocation11 + $0x50] sm:$0xff]
        %v1607 = vld [vmem:[#allocation11 + $0x58] sm:$0xff]
        %v1608 = vld [vmem:[#allocation11 + $0x60] sm:$0xff]
        %v1609 = vld [vmem:[#allocation11 + $0x68] sm:$0xff]
        %v1610 = vld [vmem:[#allocation11 + $0x70] sm:$0xff]
        %v1611 = vld [vmem:[#allocation11 + $0x78] sm:$0xff]
        %1612 = vmatprep.subr.mxu0 0.0
        %1613 = vmatpush1.msra.mxu0 %v1596
        %1614 = vmatprep.subr.mxu0 0.0
        %1615 = vmatpush1.msra.mxu0 %v1597
        %1616 = vmatprep.subr.mxu0 0.0
        %1617 = vmatpush1.msra.mxu0 %v1598
        %1618 = vmatprep.subr.mxu0 0.0
        %1619 = vmatpush1.msra.mxu0 %v1599
        %1620 = vmatprep.subr.mxu0 0.0
        %1621 = vmatpush1.msra.mxu0 %v1600
        %1622 = vmatprep.subr.mxu0 0.0
        %1623 = vmatpush1.msra.mxu0 %v1601
        %1624 = vmatprep.subr.mxu0 0.0
        %1625 = vmatpush1.msra.mxu0 %v1602
        %1626 = vmatprep.subr.mxu0 0.0
        %1627 = vmatpush1.msra.mxu0 %v1603
        %1628 = vmatprep.subr.mxu0 0.0
        %1629 = vmatpush1.msra.mxu0 %v1604
        %1630 = vmatprep.subr.mxu0 0.0
        %1631 = vmatpush1.msra.mxu0 %v1605
        %1632 = vmatprep.subr.mxu0 0.0
        %1633 = vmatpush1.msra.mxu0 %v1606
        %1634 = vmatprep.subr.mxu0 0.0
        %1635 = vmatpush1.msra.mxu0 %v1607
        %1636 = vmatprep.subr.mxu0 0.0
        %1637 = vmatpush1.msra.mxu0 %v1608
        %1638 = vmatprep.subr.mxu0 0.0
        %1639 = vmatpush1.msra.mxu0 %v1609
        %1640 = vmatprep.subr.mxu0 0.0
        %1641 = vmatpush1.msra.mxu0 %v1610
        %1642 = vmatprep.subr.mxu0 0.0
        %1643 = vmatpush1.msra.mxu0 %v1611
        %1644 = vmatprep.subr.mxu0 0.0
        %1645 = vmatpush1.msra.mxu0 0.0
        %1646 = vmatprep.subr.mxu0 0.0
        %1647 = vmatpush1.msra.mxu0 0.0
        %1648 = vmatprep.subr.mxu0 0.0
        %1649 = vmatpush1.msra.mxu0 0.0
        %1650 = vmatprep.subr.mxu0 0.0
        %1651 = vmatpush1.msra.mxu0 0.0
        %1652 = vmatprep.subr.mxu0 0.0
        %1653 = vmatpush1.msra.mxu0 0.0
        %1654 = vmatprep.subr.mxu0 0.0
        %1655 = vmatpush1.msra.mxu0 0.0
        %1656 = vmatprep.subr.mxu0 0.0
        %1657 = vmatpush1.msra.mxu0 0.0
        %1658 = vmatprep.subr.mxu0 0.0
        %1659 = vmatpush1.msra.mxu0 0.0
        %1660 = vmatprep.subr.mxu0 0.0
        %1661 = vmatpush1.msra.mxu0 0.0
        %1662 = vmatprep.subr.mxu0 0.0
        %1663 = vmatpush1.msra.mxu0 0.0
        %1664 = vmatprep.subr.mxu0 0.0
        %1665 = vmatpush1.msra.mxu0 0.0
        %1666 = vmatprep.subr.mxu0 0.0
        %1667 = vmatpush1.msra.mxu0 0.0
        %1668 = vmatprep.subr.mxu0 0.0
        %1669 = vmatpush1.msra.mxu0 0.0
        %1670 = vmatprep.subr.mxu0 0.0
        %1671 = vmatpush1.msra.mxu0 0.0
        %1672 = vmatprep.subr.mxu0 0.0
        %1673 = vmatpush1.msra.mxu0 0.0
        %1674 = vmatprep.subr.mxu0 0.0
        %1675 = vmatpush1.msra.mxu0 0.0
        %1676 = vmatprep.mubr.f32.mxu0 0.0
        %1677 = vmatmul.mubr.f32.gmra.mrb[0].mxu0 %v1595
        %v1678 = vpop.f32.mrb[0].mxu0
        %v1679 = vadd.f32 0.0, %v1678
        %v1680 = vpop.f32.mrb[0].mxu0
        %1681 = vdwg.mxu0
        %1682 = vmatprep.subr.mxu0 0.0
        %1683 = vmatpush1.msra.mxu0 %v1579
        %1684 = vmatprep.subr.mxu0 0.0
        %1685 = vmatpush1.msra.mxu0 %v1580
        %1686 = vmatprep.subr.mxu0 0.0
        %1687 = vmatpush1.msra.mxu0 %v1581
        %1688 = vmatprep.subr.mxu0 0.0
        %1689 = vmatpush1.msra.mxu0 %v1582
        %1690 = vmatprep.subr.mxu0 0.0
        %1691 = vmatpush1.msra.mxu0 %v1583
        %1692 = vmatprep.subr.mxu0 0.0
        %1693 = vmatpush1.msra.mxu0 %v1584
        %1694 = vmatprep.subr.mxu0 0.0
        %1695 = vmatpush1.msra.mxu0 %v1585
        %1696 = vmatprep.subr.mxu0 0.0
        %1697 = vmatpush1.msra.mxu0 %v1586
        %1698 = vmatprep.subr.mxu0 0.0
        %1699 = vmatpush1.msra.mxu0 %v1587
        %1700 = vmatprep.subr.mxu0 0.0
        %1701 = vmatpush1.msra.mxu0 %v1588
        %1702 = vmatprep.subr.mxu0 0.0
        %1703 = vmatpush1.msra.mxu0 %v1589
        %1704 = vmatprep.subr.mxu0 0.0
        %1705 = vmatpush1.msra.mxu0 %v1590
        %1706 = vmatprep.subr.mxu0 0.0
        %1707 = vmatpush1.msra.mxu0 %v1591
        %1708 = vmatprep.subr.mxu0 0.0
        %1709 = vmatpush1.msra.mxu0 %v1592
        %1710 = vmatprep.subr.mxu0 0.0
        %1711 = vmatpush1.msra.mxu0 %v1593
        %1712 = vmatprep.subr.mxu0 0.0
        %1713 = vmatpush1.msra.mxu0 %v1594
        %1714 = vmatprep.subr.mxu0 0.0
        %1715 = vmatpush1.msra.mxu0 0.0
        %1716 = vmatprep.subr.mxu0 0.0
        %1717 = vmatpush1.msra.mxu0 0.0
        %1718 = vmatprep.subr.mxu0 0.0
        %1719 = vmatpush1.msra.mxu0 0.0
        %1720 = vmatprep.subr.mxu0 0.0
        %1721 = vmatpush1.msra.mxu0 0.0
        %1722 = vmatprep.subr.mxu0 0.0
        %1723 = vmatpush1.msra.mxu0 0.0
        %1724 = vmatprep.subr.mxu0 0.0
        %1725 = vmatpush1.msra.mxu0 0.0
        %1726 = vmatprep.subr.mxu0 0.0
        %1727 = vmatpush1.msra.mxu0 0.0
        %1728 = vmatprep.subr.mxu0 0.0
        %1729 = vmatpush1.msra.mxu0 0.0
        %1730 = vmatprep.subr.mxu0 0.0
        %1731 = vmatpush1.msra.mxu0 0.0
        %1732 = vmatprep.subr.mxu0 0.0
        %1733 = vmatpush1.msra.mxu0 0.0
        %1734 = vmatprep.subr.mxu0 0.0
        %1735 = vmatpush1.msra.mxu0 0.0
        %1736 = vmatprep.subr.mxu0 0.0
        %1737 = vmatpush1.msra.mxu0 0.0
        %1738 = vmatprep.subr.mxu0 0.0
        %1739 = vmatpush1.msra.mxu0 0.0
        %1740 = vmatprep.subr.mxu0 0.0
        %1741 = vmatpush1.msra.mxu0 0.0
        %1742 = vmatprep.subr.mxu0 0.0
        %1743 = vmatpush1.msra.mxu0 0.0
        %1744 = vmatprep.subr.mxu0 0.0
        %1745 = vmatpush1.msra.mxu0 0.0
        %1746 = vmatprep.mubr.f32.mxu0 0.0
        %1747 = vmatmul.mubr.f32.gmra.mrb[0].mxu0 %v1438
        %v1748 = vpop.f32.mrb[0].mxu0
        %v1749 = vadd.f32 %v1679, %v1748
        %v1750 = vpop.f32.mrb[0].mxu0
        %1751 = vdwg.mxu0
        %v1752 = vld [vmem:[#allocation13] sm:$0x1]
        %v1754 = vlaneseq
        %v1755 = vshrl.u32 %v1754, 7
        %v1756 = vsub.s32 0, %v1755
        %v1757 = vrot.slane %v1752, %v1756
        %v1759 = vadd.f32 %v1749, %v1757
        %v1760 = vxor.u32 %v1759, 2147483648
        %v1761 = vmul.f32 %v1760, 1.442695
        %v1762 = vpow.pop %v1761
        %v1763 = vadd.f32 %v1762, 1.0
        %v1764 = vrcp.pop %v1763
        %v1765 = vmul.f32 1.0, %v1764
        %v1766 = vmul.f32 %v1759, %v1765
        %v1767 = vld [vmem:[#allocation14] sm:$0xff]
        %v1768 = vld [vmem:[#allocation14 + $0x8] sm:$0xff]
        %v1769 = vld [vmem:[#allocation14 + $0x10] sm:$0xff]
        %v1770 = vld [vmem:[#allocation14 + $0x18] sm:$0xff]
        %v1771 = vld [vmem:[#allocation14 + $0x20] sm:$0xff]
        %v1772 = vld [vmem:[#allocation14 + $0x28] sm:$0xff]
        %v1773 = vld [vmem:[#allocation14 + $0x30] sm:$0xff]
        %v1774 = vld [vmem:[#allocation14 + $0x38] sm:$0xff]
        %v1775 = vld [vmem:[#allocation14 + $0x40] sm:$0xff]
        %v1776 = vld [vmem:[#allocation14 + $0x48] sm:$0xff]
        %v1777 = vld [vmem:[#allocation14 + $0x50] sm:$0xff]
        %v1778 = vld [vmem:[#allocation14 + $0x58] sm:$0xff]
        %v1779 = vld [vmem:[#allocation14 + $0x60] sm:$0xff]
        %v1780 = vld [vmem:[#allocation14 + $0x68] sm:$0xff]
        %v1781 = vld [vmem:[#allocation14 + $0x70] sm:$0xff]
        %v1782 = vld [vmem:[#allocation14 + $0x78] sm:$0xff]
        %v1783 = vld [vmem:[#allocation14 + $0x80] sm:$0xff]
        %v1784 = vld [vmem:[#allocation14 + $0x88] sm:$0xff]
        %v1785 = vld [vmem:[#allocation14 + $0x90] sm:$0xff]
        %v1786 = vld [vmem:[#allocation14 + $0x98] sm:$0xff]
        %v1787 = vld [vmem:[#allocation14 + $0xa0] sm:$0xff]
        %v1788 = vld [vmem:[#allocation14 + $0xa8] sm:$0xff]
        %v1789 = vld [vmem:[#allocation14 + $0xb0] sm:$0xff]
        %v1790 = vld [vmem:[#allocation14 + $0xb8] sm:$0xff]
        %v1791 = vld [vmem:[#allocation14 + $0xc0] sm:$0xff]
        %v1792 = vld [vmem:[#allocation14 + $0xc8] sm:$0xff]
        %v1793 = vld [vmem:[#allocation14 + $0xd0] sm:$0xff]
        %v1794 = vld [vmem:[#allocation14 + $0xd8] sm:$0xff]
        %v1795 = vld [vmem:[#allocation14 + $0xe0] sm:$0xff]
        %v1796 = vld [vmem:[#allocation14 + $0xe8] sm:$0xff]
        %v1797 = vld [vmem:[#allocation14 + $0xf0] sm:$0xff]
        %v1798 = vld [vmem:[#allocation14 + $0xf8] sm:$0xff]
        %v1799 = vld [vmem:[#allocation14 + $0x100] sm:$0xff]
        %v1800 = vld [vmem:[#allocation14 + $0x108] sm:$0xff]
        %v1801 = vld [vmem:[#allocation14 + $0x110] sm:$0xff]
        %v1802 = vld [vmem:[#allocation14 + $0x118] sm:$0xff]
        %v1803 = vld [vmem:[#allocation14 + $0x120] sm:$0xff]
        %v1804 = vld [vmem:[#allocation14 + $0x128] sm:$0xff]
        %v1805 = vld [vmem:[#allocation14 + $0x130] sm:$0xff]
        %v1806 = vld [vmem:[#allocation14 + $0x138] sm:$0xff]
        %v1807 = vld [vmem:[#allocation14 + $0x140] sm:$0xff]
        %v1808 = vld [vmem:[#allocation14 + $0x148] sm:$0xff]
        %v1809 = vld [vmem:[#allocation14 + $0x150] sm:$0xff]
        %v1810 = vld [vmem:[#allocation14 + $0x158] sm:$0xff]
        %v1811 = vld [vmem:[#allocation14 + $0x160] sm:$0xff]
        %v1812 = vld [vmem:[#allocation14 + $0x168] sm:$0xff]
        %v1813 = vld [vmem:[#allocation14 + $0x170] sm:$0xff]
        %v1814 = vld [vmem:[#allocation14 + $0x178] sm:$0xff]
        %v1815 = vld [vmem:[#allocation14 + $0x180] sm:$0xff]
        %v1816 = vld [vmem:[#allocation14 + $0x188] sm:$0xff]
        %v1817 = vld [vmem:[#allocation14 + $0x190] sm:$0xff]
        %v1818 = vld [vmem:[#allocation14 + $0x198] sm:$0xff]
        %v1819 = vld [vmem:[#allocation14 + $0x1a0] sm:$0xff]
        %v1820 = vld [vmem:[#allocation14 + $0x1a8] sm:$0xff]
        %v1821 = vld [vmem:[#allocation14 + $0x1b0] sm:$0xff]
        %v1822 = vld [vmem:[#allocation14 + $0x1b8] sm:$0xff]
        %v1823 = vld [vmem:[#allocation14 + $0x1c0] sm:$0xff]
        %v1824 = vld [vmem:[#allocation14 + $0x1c8] sm:$0xff]
        %v1825 = vld [vmem:[#allocation14 + $0x1d0] sm:$0xff]
        %v1826 = vld [vmem:[#allocation14 + $0x1d8] sm:$0xff]
        %v1827 = vld [vmem:[#allocation14 + $0x1e0] sm:$0xff]
        %v1828 = vld [vmem:[#allocation14 + $0x1e8] sm:$0xff]
        %v1829 = vld [vmem:[#allocation14 + $0x1f0] sm:$0xff]
        %v1830 = vld [vmem:[#allocation14 + $0x1f8] sm:$0xff]
        %v1831 = vld [vmem:[#allocation14 + $0x200] sm:$0xff]
        %v1832 = vld [vmem:[#allocation14 + $0x208] sm:$0xff]
        %v1833 = vld [vmem:[#allocation14 + $0x210] sm:$0xff]
        %v1834 = vld [vmem:[#allocation14 + $0x218] sm:$0xff]
        %v1835 = vld [vmem:[#allocation14 + $0x220] sm:$0xff]
        %v1836 = vld [vmem:[#allocation14 + $0x228] sm:$0xff]
        %v1837 = vld [vmem:[#allocation14 + $0x230] sm:$0xff]
        %v1838 = vld [vmem:[#allocation14 + $0x238] sm:$0xff]
        %v1839 = vld [vmem:[#allocation14 + $0x240] sm:$0xff]
        %v1840 = vld [vmem:[#allocation14 + $0x248] sm:$0xff]
        %v1841 = vld [vmem:[#allocation14 + $0x250] sm:$0xff]
        %v1842 = vld [vmem:[#allocation14 + $0x258] sm:$0xff]
        %v1843 = vld [vmem:[#allocation14 + $0x260] sm:$0xff]
        %v1844 = vld [vmem:[#allocation14 + $0x268] sm:$0xff]
        %v1845 = vld [vmem:[#allocation14 + $0x270] sm:$0xff]
        %v1846 = vld [vmem:[#allocation14 + $0x278] sm:$0xff]
        %v1847 = vld [vmem:[#allocation16] sm:$0x1f]
        %v1849 = vlaneseq
        %v1850 = vshrl.u32 %v1849, 7
        %v1851 = vsub.s32 0, %v1850
        %v1852 = vrot.slane %v1847, %v1851
        %v1853 = vlaneseq
        %v1854 = vshrl.u32 %v1853, 7
        %v1855 = vsub.s32 1, %v1854
        %v1856 = vrot.slane %v1847, %v1855
        %v1857 = vlaneseq
        %v1858 = vshrl.u32 %v1857, 7
        %v1859 = vsub.s32 2, %v1858
        %v1860 = vrot.slane %v1847, %v1859
        %v1861 = vlaneseq
        %v1862 = vshrl.u32 %v1861, 7
        %v1863 = vsub.s32 3, %v1862
        %v1864 = vrot.slane %v1847, %v1863
        %v1865 = vlaneseq
        %v1866 = vshrl.u32 %v1865, 7
        %v1867 = vsub.s32 4, %v1866
        %v1868 = vrot.slane %v1847, %v1867
        %1874 = vmatprep.subr.mxu0 %v1768
        %1875 = vmatpush1.msra.mxu0 %v1767
        %1876 = vmatprep.subr.mxu0 %v1773
        %1877 = vmatpush1.msra.mxu0 %v1772
        %1878 = vmatprep.subr.mxu0 %v1778
        %1879 = vmatpush1.msra.mxu0 %v1777
        %1880 = vmatprep.subr.mxu0 %v1783
        %1881 = vmatpush1.msra.mxu0 %v1782
        %1882 = vmatprep.subr.mxu0 %v1788
        %1883 = vmatpush1.msra.mxu0 %v1787
        %1884 = vmatprep.subr.mxu0 %v1793
        %1885 = vmatpush1.msra.mxu0 %v1792
        %1886 = vmatprep.subr.mxu0 %v1798
        %1887 = vmatpush1.msra.mxu0 %v1797
        %1888 = vmatprep.subr.mxu0 %v1803
        %1889 = vmatpush1.msra.mxu0 %v1802
        %1890 = vmatprep.subr.mxu0 %v1808
        %1891 = vmatpush1.msra.mxu0 %v1807
        %1892 = vmatprep.subr.mxu0 %v1813
        %1893 = vmatpush1.msra.mxu0 %v1812
        %1894 = vmatprep.subr.mxu0 %v1818
        %1895 = vmatpush1.msra.mxu0 %v1817
        %1896 = vmatprep.subr.mxu0 %v1823
        %1897 = vmatpush1.msra.mxu0 %v1822
        %1898 = vmatprep.subr.mxu0 %v1828
        %1899 = vmatpush1.msra.mxu0 %v1827
        %1900 = vmatprep.subr.mxu0 %v1833
        %1901 = vmatpush1.msra.mxu0 %v1832
        %1902 = vmatprep.subr.mxu0 %v1838
        %1903 = vmatpush1.msra.mxu0 %v1837
        %1904 = vmatprep.subr.mxu0 %v1843
        %1905 = vmatpush1.msra.mxu0 %v1842
        %1906 = vmatprep.subr.mxu0 0.0
        %1907 = vmatpush1.msra.mxu0 0.0
        %1908 = vmatprep.subr.mxu0 0.0
        %1909 = vmatpush1.msra.mxu0 0.0
        %1910 = vmatprep.subr.mxu0 0.0
        %1911 = vmatpush1.msra.mxu0 0.0
        %1912 = vmatprep.subr.mxu0 0.0
        %1913 = vmatpush1.msra.mxu0 0.0
        %1914 = vmatprep.subr.mxu0 0.0
        %1915 = vmatpush1.msra.mxu0 0.0
        %1916 = vmatprep.subr.mxu0 0.0
        %1917 = vmatpush1.msra.mxu0 0.0
        %1918 = vmatprep.subr.mxu0 0.0
        %1919 = vmatpush1.msra.mxu0 0.0
        %1920 = vmatprep.subr.mxu0 0.0
        %1921 = vmatpush1.msra.mxu0 0.0
        %1922 = vmatprep.subr.mxu0 0.0
        %1923 = vmatpush1.msra.mxu0 0.0
        %1924 = vmatprep.subr.mxu0 0.0
        %1925 = vmatpush1.msra.mxu0 0.0
        %1926 = vmatprep.subr.mxu0 0.0
        %1927 = vmatpush1.msra.mxu0 0.0
        %1928 = vmatprep.subr.mxu0 0.0
        %1929 = vmatpush1.msra.mxu0 0.0
        %1930 = vmatprep.subr.mxu0 0.0
        %1931 = vmatpush1.msra.mxu0 0.0
        %1932 = vmatprep.subr.mxu0 0.0
        %1933 = vmatpush1.msra.mxu0 0.0
        %1934 = vmatprep.subr.mxu0 0.0
        %1935 = vmatpush1.msra.mxu0 0.0
        %1936 = vmatprep.subr.mxu0 0.0
        %1937 = vmatpush1.msra.mxu0 0.0
        %1938 = vmatprep.mubr.f32.mxu0 0.0
        %1939 = vmatmul.mubr.f32.gmra.mrb[0].mxu0 %v1766
        %v1940 = vpop.f32.mrb[0].mxu0
        %v1941 = vadd.f32 %v1852, %v1940
        %v1942 = vpop.f32.mrb[0].mxu0
        %v1943 = vadd.f32 %v1856, %v1942
        %1944 = vdwg.mxu0
        %1945 = vmatprep.subr.mxu0 %v1770
        %1946 = vmatpush1.msra.mxu0 %v1769
        %1947 = vmatprep.subr.mxu0 %v1775
        %1948 = vmatpush1.msra.mxu0 %v1774
        %1949 = vmatprep.subr.mxu0 %v1780
        %1950 = vmatpush1.msra.mxu0 %v1779
        %1951 = vmatprep.subr.mxu0 %v1785
        %1952 = vmatpush1.msra.mxu0 %v1784
        %1953 = vmatprep.subr.mxu0 %v1790
        %1954 = vmatpush1.msra.mxu0 %v1789
        %1955 = vmatprep.subr.mxu0 %v1795
        %1956 = vmatpush1.msra.mxu0 %v1794
        %1957 = vmatprep.subr.mxu0 %v1800
        %1958 = vmatpush1.msra.mxu0 %v1799
        %1959 = vmatprep.subr.mxu0 %v1805
        %1960 = vmatpush1.msra.mxu0 %v1804
        %1961 = vmatprep.subr.mxu0 %v1810
        %1962 = vmatpush1.msra.mxu0 %v1809
        %1963 = vmatprep.subr.mxu0 %v1815
        %1964 = vmatpush1.msra.mxu0 %v1814
        %1965 = vmatprep.subr.mxu0 %v1820
        %1966 = vmatpush1.msra.mxu0 %v1819
        %1967 = vmatprep.subr.mxu0 %v1825
        %1968 = vmatpush1.msra.mxu0 %v1824
        %1969 = vmatprep.subr.mxu0 %v1830
        %1970 = vmatpush1.msra.mxu0 %v1829
        %1971 = vmatprep.subr.mxu0 %v1835
        %1972 = vmatpush1.msra.mxu0 %v1834
        %1973 = vmatprep.subr.mxu0 %v1840
        %1974 = vmatpush1.msra.mxu0 %v1839
        %1975 = vmatprep.subr.mxu0 %v1845
        %1976 = vmatpush1.msra.mxu0 %v1844
        %1977 = vmatprep.subr.mxu0 0.0
        %1978 = vmatpush1.msra.mxu0 0.0
        %1979 = vmatprep.subr.mxu0 0.0
        %1980 = vmatpush1.msra.mxu0 0.0
        %1981 = vmatprep.subr.mxu0 0.0
        %1982 = vmatpush1.msra.mxu0 0.0
        %1983 = vmatprep.subr.mxu0 0.0
        %1984 = vmatpush1.msra.mxu0 0.0
        %1985 = vmatprep.subr.mxu0 0.0
        %1986 = vmatpush1.msra.mxu0 0.0
        %1987 = vmatprep.subr.mxu0 0.0
        %1988 = vmatpush1.msra.mxu0 0.0
        %1989 = vmatprep.subr.mxu0 0.0
        %1990 = vmatpush1.msra.mxu0 0.0
        %1991 = vmatprep.subr.mxu0 0.0
        %1992 = vmatpush1.msra.mxu0 0.0
        %1993 = vmatprep.subr.mxu0 0.0
        %1994 = vmatpush1.msra.mxu0 0.0
        %1995 = vmatprep.subr.mxu0 0.0
        %1996 = vmatpush1.msra.mxu0 0.0
        %1997 = vmatprep.subr.mxu0 0.0
        %1998 = vmatpush1.msra.mxu0 0.0
        %1999 = vmatprep.subr.mxu0 0.0
        %2000 = vmatpush1.msra.mxu0 0.0
        %2001 = vmatprep.subr.mxu0 0.0
        %2002 = vmatpush1.msra.mxu0 0.0
        %2003 = vmatprep.subr.mxu0 0.0
        %2004 = vmatpush1.msra.mxu0 0.0
        %2005 = vmatprep.subr.mxu0 0.0
        %2006 = vmatpush1.msra.mxu0 0.0
        %2007 = vmatprep.subr.mxu0 0.0
        %2008 = vmatpush1.msra.mxu0 0.0
        %2009 = vmatprep.mubr.f32.mxu0 0.0
        %2010 = vmatmul.mubr.f32.gmra.mrb[0].mxu0 %v1766
        %v2011 = vpop.f32.mrb[0].mxu0
        %v2012 = vadd.f32 %v1860, %v2011
        %v2013 = vpop.f32.mrb[0].mxu0
        %v2014 = vadd.f32 %v1864, %v2013
        %2015 = vdwg.mxu0
        %2016 = vmatprep.subr.mxu0 0.0
        %2017 = vmatpush1.msra.mxu0 %v1771
        %2018 = vmatprep.subr.mxu0 0.0
        %2019 = vmatpush1.msra.mxu0 %v1776
        %2020 = vmatprep.subr.mxu0 0.0
        %2021 = vmatpush1.msra.mxu0 %v1781
        %2022 = vmatprep.subr.mxu0 0.0
        %2023 = vmatpush1.msra.mxu0 %v1786
        %2024 = vmatprep.subr.mxu0 0.0
        %2025 = vmatpush1.msra.mxu0 %v1791
        %2026 = vmatprep.subr.mxu0 0.0
        %2027 = vmatpush1.msra.mxu0 %v1796
        %2028 = vmatprep.subr.mxu0 0.0
        %2029 = vmatpush1.msra.mxu0 %v1801
        %2030 = vmatprep.subr.mxu0 0.0
        %2031 = vmatpush1.msra.mxu0 %v1806
        %2032 = vmatprep.subr.mxu0 0.0
        %2033 = vmatpush1.msra.mxu0 %v1811
        %2034 = vmatprep.subr.mxu0 0.0
        %2035 = vmatpush1.msra.mxu0 %v1816
        %2036 = vmatprep.subr.mxu0 0.0
        %2037 = vmatpush1.msra.mxu0 %v1821
        %2038 = vmatprep.subr.mxu0 0.0
        %2039 = vmatpush1.msra.mxu0 %v1826
        %2040 = vmatprep.subr.mxu0 0.0
        %2041 = vmatpush1.msra.mxu0 %v1831
        %2042 = vmatprep.subr.mxu0 0.0
        %2043 = vmatpush1.msra.mxu0 %v1836
        %2044 = vmatprep.subr.mxu0 0.0
        %2045 = vmatpush1.msra.mxu0 %v1841
        %2046 = vmatprep.subr.mxu0 0.0
        %2047 = vmatpush1.msra.mxu0 %v1846
        %2048 = vmatprep.subr.mxu0 0.0
        %2049 = vmatpush1.msra.mxu0 0.0
        %2050 = vmatprep.subr.mxu0 0.0
        %2051 = vmatpush1.msra.mxu0 0.0
        %2052 = vmatprep.subr.mxu0 0.0
        %2053 = vmatpush1.msra.mxu0 0.0
        %2054 = vmatprep.subr.mxu0 0.0
        %2055 = vmatpush1.msra.mxu0 0.0
        %2056 = vmatprep.subr.mxu0 0.0
        %2057 = vmatpush1.msra.mxu0 0.0
        %2058 = vmatprep.subr.mxu0 0.0
        %2059 = vmatpush1.msra.mxu0 0.0
        %2060 = vmatprep.subr.mxu0 0.0
        %2061 = vmatpush1.msra.mxu0 0.0
        %2062 = vmatprep.subr.mxu0 0.0
        %2063 = vmatpush1.msra.mxu0 0.0
        %2064 = vmatprep.subr.mxu0 0.0
        %2065 = vmatpush1.msra.mxu0 0.0
        %2066 = vmatprep.subr.mxu0 0.0
        %2067 = vmatpush1.msra.mxu0 0.0
        %2068 = vmatprep.subr.mxu0 0.0
        %2069 = vmatpush1.msra.mxu0 0.0
        %2070 = vmatprep.subr.mxu0 0.0
        %2071 = vmatpush1.msra.mxu0 0.0
        %2072 = vmatprep.subr.mxu0 0.0
        %2073 = vmatpush1.msra.mxu0 0.0
        %2074 = vmatprep.subr.mxu0 0.0
        %2075 = vmatpush1.msra.mxu0 0.0
        %2076 = vmatprep.subr.mxu0 0.0
        %2077 = vmatpush1.msra.mxu0 0.0
        %2078 = vmatprep.subr.mxu0 0.0
        %2079 = vmatpush1.msra.mxu0 0.0
        %2080 = vmatprep.mubr.f32.mxu0 0.0
        %2081 = vmatmul.mubr.f32.gmra.mrb[0].mxu0 %v1766
        %v2082 = vpop.f32.mrb[0].mxu0
        %v2083 = vadd.f32 %v1868, %v2082
        %v2084 = vpop.f32.mrb[0].mxu0
        %2085 = vdwg.mxu0
        %v2086 = vmul.f32 %v950, %v1941
        %v2087 = vmul.f32 %v952, %v1943
        %v2088 = vmul.f32 %v1092, %v2012
        %2089 = vst [vmem:[%s513] sm:$0xff] %v2086
        %2090 = vst [vmem:[%s513 + $0x8] sm:$0xff] %v2087
        %2091 = vst [vmem:[%s513 + $0x10] sm:$0xff] %v2088
        %v2092 = vmul.f32 %v1576, %v2014
        %v2093 = vadd.f32 %v2092, %v2083
        %2094 = vst [vmem:[%s520] sm:$0xff] %v2093
        %s2095 = sand.u32 %s244, 1
        %s2096 = scalar_lea.sflag [#allocation4], %s2095
        %s2097 = sand.u32 %s244, 1
        %s2098 = smul.addr %s2097, 24
        %s2099 = scalar_lea.vmem [#allocation17], %s2098
        %s2100 = sand.u32 %s270, 1
        %s2101 = scalar_lea.sflag [#allocation19], %s2100
        %s2102 = sand.u32 %s270, 1
        %s2103 = smul.addr %s2102, 8
        %s2104 = scalar_lea.vmem [#allocation18], %s2103
        // Predicated region
        $region93: #{tpu_custom_call.1} parent=55 // pred_check
          %p2105 = pneg %p254
        $region94: #{tpu_custom_call.1} parent=55 // pred_check_branch
          %2107 = sbr.rel (%p2105) target = $region96
        $region95: #{tpu_custom_call.1} parent=55 // pred_region
          %s2109 = ssub.s32 384, 384
          %2110 = vsyncadd %s2096, %s2109
          %s2111 = smul.addr %s37, 3
          %s2112 = smul.addr %s2111, 128
          %s2113 = scalar_lea.hbm %s9, %s2112
          %s2115 = sshll.u32 %s2099, 4
          %s2116 = int_to_ptr.vmem [resolvable:$true] %s2115
          %2118 = dma.vmem_to_hbm [thread:$0]  %s2116, 384, %s2113, %s2096
        $region96: #{tpu_custom_call.1} parent=55 // pred_fallthru
          _
        // Predicated region
        $region97: #{tpu_custom_call.1} parent=55 // pred_check
          %p2119 = pneg %p280
        $region98: #{tpu_custom_call.1} parent=55 // pred_check_branch
          %2121 = sbr.rel (%p2119) target = $region100
        $region99: #{tpu_custom_call.1} parent=55 // pred_region
          %s2123 = ssub.s32 128, 128
          %2124 = vsyncadd %s2101, %s2123
          %s2125 = smul.addr %s37, 128
          %s2126 = scalar_lea.hbm %s10, %s2125
          %s2128 = sshll.u32 %s2104, 4
          %s2129 = int_to_ptr.vmem [resolvable:$true] %s2128
          %2131 = dma.vmem_to_hbm [thread:$0]  %s2129, 128, %s2126, %s2101
        $region100: #{tpu_custom_call.1} parent=55 // pred_fallthru
          _
      $region56: #{tpu_custom_call.1} parent=5 // pred_fallthru
        _
      %p2132 = scmp.le.s32.totalorder 2, %s32
      // Predicated region
      $region101: #{tpu_custom_call.1} parent=5 // pred_check
        %p2133 = pneg %p2132
      $region102: #{tpu_custom_call.1} parent=5 // pred_check_branch
        %2135 = sbr.rel (%p2133) target = $region104
      $region103: #{tpu_custom_call.1} parent=5 // pred_region
        %s2136 = ssub.s32 %s32, 2
        // Predicated region
        $region105: #{tpu_custom_call.1} parent=103 // pred_check
          %p2137 = pneg %p260
        $region106: #{tpu_custom_call.1} parent=103 // pred_check_branch
          %2139 = sbr.rel (%p2137) target = $region108
        $region107: #{tpu_custom_call.1} parent=103 // pred_region
          %s2140 = sand.u32 %s245, 1
          %s2141 = scalar_lea.sflag [#allocation4], %s2140
          %s2142 = sand.u32 %s245, 1
          %s2143 = smul.addr %s2142, 24
          %s2144 = scalar_lea.vmem [#allocation17], %s2143
          %2145 = dma.done %s2141, 384
        $region108: #{tpu_custom_call.1} parent=103 // pred_fallthru
          _
        // Predicated region
        $region109: #{tpu_custom_call.1} parent=103 // pred_check
          %p2146 = pneg %p286
        $region110: #{tpu_custom_call.1} parent=103 // pred_check_branch
          %2148 = sbr.rel (%p2146) target = $region112
        $region111: #{tpu_custom_call.1} parent=103 // pred_region
          %s2149 = sand.u32 %s271, 1
          %s2150 = scalar_lea.sflag [#allocation19], %s2149
          %s2151 = sand.u32 %s271, 1
          %s2152 = smul.addr %s2151, 8
          %s2153 = scalar_lea.vmem [#allocation18], %s2152
          %2154 = dma.done %s2150, 128
        $region112: #{tpu_custom_call.1} parent=103 // pred_fallthru
          _
      $region104: #{tpu_custom_call.1} parent=5 // pred_fallthru
        _
    $region6: #{tpu_custom_call.1} parent=1 // loop_footer
      %s36 = sadd.s32 1, %s32
    $region7: #{tpu_custom_call.1} parent=1 // loop_footer_branch
      %31 = sbr.rel target = $region3
    $region8: #{tpu_custom_call.1} parent=1 // loop_exit
      _
    %2155 = vsyncpa [#allocation3], 1
    %s2156 = scalar_lea.sflag [#allocation3], 1
    %2157 = vsyncpa %s2156, 1
    %2158 = vsyncpa [#allocation6], 1
    %s2159 = scalar_lea.sflag [#allocation6], 1
    %2160 = vsyncpa %s2159, 1
    %2161 = vsyncpa [#allocation9], 1
    %2162 = vsyncpa [#allocation12], 1
    %2163 = vsyncpa [#allocation15], 1
    %2164 = vsyncpa [#allocation4], 1
    %s2165 = scalar_lea.sflag [#allocation4], 1
    %2166 = vsyncpa %s2165, 1
    %2167 = vsyncpa [#allocation19], 1
    %s2168 = scalar_lea.sflag [#allocation19], 1
    %2169 = vsyncpa %s2168, 1

</llo_original>
